<compile_context>
chip_gen: v6e
topology: v6e:2x2x1
jax: 0.10.0
libtpu: 0.0.40
codegen_flags: <defaults>
</compile_context>

<pallas_src>
import functools
import math

import jax
import jax.numpy as jnp
from jax import lax
from jax.experimental import pallas as pl
from jax.experimental.pallas import tpu as pltpu

SELU_ALPHA = 1.6732632423543772
SELU_SCALE = 1.0507009873554805
LN_EPS = 1e-5            # PyTorch nn.LayerNorm default
NEG_INF = -1e30          # mask applied on f32 scores


# ------------------------------ small helpers ------------------------------ #

def _selu(x):
    return SELU_SCALE * jnp.where(x > 0, x, SELU_ALPHA * (jnp.exp(x) - 1.0))


def _layer_norm(y, g, b):
    mean = jnp.mean(y, axis=-1, keepdims=True)
    var = jnp.mean((y - mean) ** 2, axis=-1, keepdims=True)
    inv = lax.rsqrt(var + LN_EPS)
    return (y - mean) * inv * g + b


def _row_tile(m, target=256):
    # Largest row tile (multiple of 8) dividing m that still gives >=2 grid
    # steps (so both v7x TensorCores get work); else the full extent.
    for t in (target, 128, 64, 32, 16, 8):
        if t <= m and m % t == 0 and m // t >= 2:
            return t
    return m


def _col_tile(n, target=512):
    # Lane-dim tile: multiple of 128 dividing n, else the full extent.
    for t in (target, 2048, 1024, 512, 256, 128):
        if t <= n and n % t == 0:
            return t
    return n


@functools.lru_cache(maxsize=None)
def _vmem_limit_bytes():
    # 75% of physical VMEM (48 MiB on v7x, 96 MiB on v5e/v6e), capped.
    try:
        cap = int(pltpu.get_tpu_info().vmem_capacity_bytes)
    except Exception:
        cap = 64 * 1024 * 1024
    return max(32 * 1024 * 1024, min(int(cap * 0.75), 100 * 1024 * 1024))


# ---- probe whether single-buffered (Buffered(1)) weight specs are accepted -- #

def _probe_copy_kernel(x_ref, o_ref):
    o_ref[...] = x_ref[...]


@functools.lru_cache(maxsize=None)
def _weight_mode():
    """pl.Buffered(1) if this Pallas build supports single-buffered constant
    blocks in pallas_call, else None (default double-buffering)."""
    try:
        f = pl.pallas_call(
            _probe_copy_kernel,
            grid=(2,),
            in_specs=[pl.BlockSpec((8, 128), lambda i: (0, 0),
                                   pipeline_mode=pl.Buffered(1))],
            out_specs=pl.BlockSpec((8, 128), lambda i: (i, 0)),
            out_shape=jax.ShapeDtypeStruct((16, 128), jnp.float32),
        )
        jax.block_until_ready(f(jnp.zeros((8, 128), jnp.float32)))
        return pl.Buffered(1)
    except Exception:
        return None


def _const_spec(shape, n_grid_dims):
    """BlockSpec for a grid-constant (weight) operand: full block, index 0,
    single-buffered when supported (halves resident weight VMEM)."""
    idx = lambda *args: tuple(0 for _ in shape)
    mode = _weight_mode()
    if mode is None:
        return pl.BlockSpec(shape, idx)
    return pl.BlockSpec(shape, idx, pipeline_mode=mode)


# ----------------------- fused multi-head attention ------------------------ #

def _mha_kernel(x_ref, y_ref, wq_ref, bq_ref, wk_ref, bk_ref, wv_ref, bv_ref,
                wo_ref, bo_ref, g_ref, bln_ref, o_ref, *, nh, causal):
    xb = x_ref[0]                        # (TQ, H) bf16 -- matmul input
    yb = y_ref[0]                        # (Sk, H) bf16
    x_res = xb.astype(jnp.float32)       # residual in f32
    tq = xb.shape[0]
    sk = yb.shape[0]

    # Causal mask computed once (hoisted out of the per-head loop); the global
    # query offset accounts for the Sq row-tile grid axis.
    if causal:
        q0 = pl.program_id(1) * tq
        qi = q0 + lax.broadcasted_iota(jnp.int32, (tq, sk), 0)
        ki = lax.broadcasted_iota(jnp.int32, (tq, sk), 1)
        keep = ki <= qi
    else:
        keep = None

    o_acc = jnp.zeros(x_res.shape, jnp.float32)
    # nh is small & static; per-head weights are indexed on the leading axis so
    # no lane-dim slicing happens and only o_acc is carried across iterations.
    # TODO(synk): for large nh switch to a lax.fori_loop / grid axis.
    for h in range(nh):
        # per-head projections (score scale is pre-folded into wq/bq at init)
        q_h = jnp.dot(xb, wq_ref[h], preferred_element_type=jnp.float32) + bq_ref[h]
        k_h = jnp.dot(yb, wk_ref[h], preferred_element_type=jnp.float32) + bk_ref[h]
        v_h = jnp.dot(yb, wv_ref[h], preferred_element_type=jnp.float32) + bv_ref[h]

        # scores: contract the last dims directly (standard flash idiom)
        s = lax.dot_general(q_h.astype(jnp.bfloat16), k_h.astype(jnp.bfloat16),
                            (((1,), (1,)), ((), ())),
                            preferred_element_type=jnp.float32)
        if keep is not None:
            s = jnp.where(keep, s, jnp.float32(NEG_INF))

        m = jnp.max(s, axis=-1, keepdims=True)
        p = jnp.exp(s - m)                                    # unnormalized
        denom = jnp.sum(p, axis=-1, keepdims=True)
        o_h = jnp.dot(p.astype(jnp.bfloat16), v_h.astype(jnp.bfloat16),
                      preferred_element_type=jnp.float32)     # (TQ, dv)
        # deferred softmax normalization: rescale (TQ, dv) instead of (TQ, Sk)
        o_h = o_h * pl.reciprocal(denom, approx=True)

        # head-merge + out-projection folded into a per-head accumulation
        o_acc = o_acc + jnp.dot(o_h.astype(jnp.bfloat16), wo_ref[h],
                                preferred_element_type=jnp.float32)

    out = o_acc + bo_ref[...]
    o_ref[0] = _layer_norm(out + x_res, g_ref[...], bln_ref[...]).astype(o_ref.dtype)


def multi_head_attention(p, q_in, kv_in, causal):
    B, Sq, H = q_in.shape
    Sk = kv_in.shape[1]
    nh, dk, dv = p["n_heads"], p["k_size"], p["v_size"]
    TQ = _row_tile(Sq)

    kern = functools.partial(_mha_kernel, nh=nh, causal=causal)
    return pl.pallas_call(
        kern,
        grid=(B, Sq // TQ),
        in_specs=[
            pl.BlockSpec((1, TQ, H), lambda b, qt: (b, qt, 0)),
            pl.BlockSpec((1, Sk, H), lambda b, qt: (b, 0, 0)),
            _const_spec((nh, H, dk), 2),
            _const_spec((nh, 1, dk), 2),
            _const_spec((nh, H, dk), 2),
            _const_spec((nh, 1, dk), 2),
            _const_spec((nh, H, dv), 2),
            _const_spec((nh, 1, dv), 2),
            _const_spec((nh, dv, H), 2),
            _const_spec((1, H), 2),
            _const_spec((1, H), 2),
            _const_spec((1, H), 2),
        ],
        out_specs=pl.BlockSpec((1, TQ, H), lambda b, qt: (b, qt, 0)),
        out_shape=jax.ShapeDtypeStruct((B, Sq, H), jnp.bfloat16),
        compiler_params=pltpu.CompilerParams(
            dimension_semantics=("parallel", "parallel"),
            vmem_limit_bytes=_vmem_limit_bytes()),
    )(q_in, kv_in, p["wq"], p["bq"], p["wk"], p["bk"], p["wv"], p["bv"],
      p["wo"], p["bo"], p["ln_g"], p["ln_b"])


# --------------------- fused position-wise FFN + LN ------------------------ #

def _ffn_kernel(x_ref, w1_ref, b1_ref, w2_ref, b2_ref, g_ref, bln_ref, o_ref):
    xb = x_ref[...]                                              # (TM, H) bf16
    h = jnp.dot(xb, w1_ref[...], preferred_element_type=jnp.float32) + b1_ref[...]
    h = _selu(h)
    y = jnp.dot(h.astype(jnp.bfloat16), w2_ref[...],
                preferred_element_type=jnp.float32) + b2_ref[...]
    o_ref[...] = _layer_norm(y + xb.astype(jnp.float32),
                             g_ref[...], bln_ref[...]).astype(o_ref.dtype)


def position_wise(p, x):
    B, S, H = x.shape
    M = B * S
    H4 = p["w1"].shape[1]
    TM = _row_tile(M)
    xf = x.reshape(M, H)
    out = pl.pallas_call(
        _ffn_kernel,
        grid=(M // TM,),
        in_specs=[
            pl.BlockSpec((TM, H), lambda i: (i, 0)),
            _const_spec((H, H4), 1),
            _const_spec((1, H4), 1),
            _const_spec((H4, H), 1),
            _const_spec((1, H), 1),
            _const_spec((1, H), 1),
            _const_spec((1, H), 1),
        ],
        out_specs=pl.BlockSpec((TM, H), lambda i: (i, 0)),
        out_shape=jax.ShapeDtypeStruct((M, H), jnp.bfloat16),
        compiler_params=pltpu.CompilerParams(
            dimension_semantics=("parallel",),
            vmem_limit_bytes=_vmem_limit_bytes()),
    )(xf, p["w1"], p["b1"], p["w2"], p["b2"], p["ln_g"], p["ln_b"])
    return out.reshape(B, S, H)


# -------------------- fused output MLP (weight-normed) --------------------- #

def _out_fc_kernel(x_ref, w1_ref, b1_ref, w2_ref, b2_ref, o_ref, h_ref):
    # hidden (Linear -> SELU) is computed once per row tile, stored in bf16,
    # and reused for every vocab tile (vocab axis is the inner grid dimension).
    @pl.when(pl.program_id(1) == 0)
    def _():
        h = jnp.dot(x_ref[...], w1_ref[...],
                    preferred_element_type=jnp.float32) + b1_ref[...]
        h_ref[...] = _selu(h).astype(h_ref.dtype)

    o_ref[...] = jnp.dot(h_ref[...], w2_ref[...],
                         preferred_element_type=jnp.float32) + b2_ref[...]


def out_fc(p, x):
    B, S, H = x.shape
    M = B * S
    H4 = p["w1"].shape[1]
    V = p["w2"].shape[1]
    TM = _row_tile(M)
    # bigger lane-dense vocab tiles on 128-MiB-VMEM chips (v5e/v6e)
    tn_target = 1024 if _vmem_limit_bytes() >= (64 << 20) else 512
    TN = _col_tile(V, target=tn_target)
    xf = x.reshape(M, H)
    out = pl.pallas_call(
        _out_fc_kernel,
        grid=(M // TM, V // TN),
        in_specs=[
            pl.BlockSpec((TM, H), lambda i, n: (i, 0)),
            _const_spec((H, H4), 2),
            _const_spec((1, H4), 2),
            pl.BlockSpec((H4, TN), lambda i, n: (0, n)),
            pl.BlockSpec((1, TN), lambda i, n: (0, n)),
        ],
        out_specs=pl.BlockSpec((TM, TN), lambda i, n: (i, n)),
        out_shape=jax.ShapeDtypeStruct((M, V), jnp.float32),
        scratch_shapes=[pltpu.VMEM((TM, H4), jnp.bfloat16)],
        compiler_params=pltpu.CompilerParams(
            dimension_semantics=("parallel", "arbitrary"),
            vmem_limit_bytes=_vmem_limit_bytes()),
    )(xf, p["w1"], p["b1"], p["w2"], p["b2"])
    return out.reshape(B, S, V)


# ------------------------------ model glue --------------------------------- #

def encoder(params, x):
    for layer in params["enc_layers"]:
        x = multi_head_attention(layer["attn"], x, x, causal=False)
        x = position_wise(layer["pw"], x)
    return x


def decoder(params, x, condition):
    for layer in params["dec_layers"]:
        x = multi_head_attention(layer["self_attn"], x, x, causal=True)
        x = multi_head_attention(layer["cross_attn"], x, condition, causal=False)
        x = position_wise(layer["pw"], x)
    return x


def transformer_forward(params, enc_input, dec_input):
    # Activations are carried between fused kernels in bf16 (halves HBM
    # traffic); LayerNorm / softmax / SELU math stays f32 inside the kernels.
    condition = encoder(params, enc_input.astype(jnp.bfloat16))
    out = decoder(params, dec_input.astype(jnp.bfloat16), condition)
    return out_fc(params["out_fc"], out)


# --------------------------- parameter creation ----------------------------- #

def weight_norm_effective(v, g):
    # PyTorch weight_norm(dim=0) on nn.Linear: w[i,:] = g[i] * v[i,:]/||v[i,:]||
    # v: (out, in), g: (out,). Returns effective weight transposed to (in, out).
    norm = jnp.sqrt(jnp.sum(v * v, axis=1, keepdims=True))
    return (g[:, None] * v / norm).T


def init_params(key, vocab_size, n_layers, n_heads, h_size, k_size, v_size):
    keys = iter(jax.random.split(key, 4096))

    def normal(shape, scale=0.05):
        return scale * jax.random.normal(next(keys), shape, jnp.float32)

    def wn_dense(fan_in, fan_out, scale=0.05):
        v = normal((fan_out, fan_in), scale)
        g = jnp.sqrt(jnp.sum(v * v, axis=1))  # PyTorch weight_norm init: g = ||v||
        w = weight_norm_effective(v, g)       # (fan_in, fan_out)
        b = jnp.zeros((1, fan_out), jnp.float32)
        return w, b

    def attn_params():
        scale = 1.0 / math.sqrt(k_size)
        # head-leading weight layout: (nh, H, d) for Q/K/V, (nh, dv, H) for O
        wq = normal((n_heads, h_size, k_size)) * scale   # score scale folded in
        bq = jnp.zeros((n_heads, 1, k_size), jnp.float32) * scale
        wk = normal((n_heads, h_size, k_size))
        bk = jnp.zeros((n_heads, 1, k_size), jnp.float32)
        wv = normal((n_heads, h_size, v_size))
        bv = jnp.zeros((n_heads, 1, v_size), jnp.float32)
        wo = normal((n_heads, v_size, h_size))
        bo = jnp.zeros((1, h_size), jnp.float32)
        return dict(n_heads=n_heads, k_size=k_size, v_size=v_size,
                    wq=wq.astype(jnp.bfloat16), bq=bq,
                    wk=wk.astype(jnp.bfloat16), bk=bk,
                    wv=wv.astype(jnp.bfloat16), bv=bv,
                    wo=wo.astype(jnp.bfloat16), bo=bo,
                    ln_g=jnp.ones((1, h_size), jnp.float32),
                    ln_b=jnp.zeros((1, h_size), jnp.float32))

    def pw_params():
        w1, b1 = wn_dense(h_size, 4 * h_size)
        w2, b2 = wn_dense(4 * h_size, h_size)
        return dict(w1=w1.astype(jnp.bfloat16), b1=b1,
                    w2=w2.astype(jnp.bfloat16), b2=b2,
                    ln_g=jnp.ones((1, h_size), jnp.float32),
                    ln_b=jnp.zeros((1, h_size), jnp.float32))

    enc_layers = [dict(attn=attn_params(), pw=pw_params()) for _ in range(n_layers)]
    dec_layers = [dict(self_attn=attn_params(), cross_attn=attn_params(),
                       pw=pw_params()) for _ in range(n_layers)]

    ow1, ob1 = wn_dense(h_size, 4 * h_size)
    ow2, ob2 = wn_dense(4 * h_size, vocab_size)
    out_fc_p = dict(w1=ow1.astype(jnp.bfloat16), b1=ob1,
                    w2=ow2.astype(jnp.bfloat16), b2=ob2)

    return dict(enc_layers=enc_layers, dec_layers=dec_layers, out_fc=out_fc_p)


# ---------------------------------- main ------------------------------------ #

if __name__ == "__main__":
    vocab_size, n_layers, n_heads = 64, 2, 2
    h_size, k_size, v_size = 32, 16, 16
    B, enc_len, dec_len = 2, 8, 8

    key = jax.random.PRNGKey(0)
    kp, ke, kd = jax.random.split(key, 3)
    params = init_params(kp, vocab_size, n_layers, n_heads, h_size, k_size, v_size)

    enc_input = jax.random.normal(ke, (B, enc_len, h_size), jnp.float32)
    dec_input = jax.random.normal(kd, (B, dec_len, h_size), jnp.float32)

    out = transformer_forward(params, enc_input, dec_input)
    out = jax.block_until_ready(out)

    assert out.shape == (B, dec_len, vocab_size), out.shape
    assert bool(jnp.all(jnp.isfinite(out)))
    print("KERNEL_OK")
</pallas_src>

<mosaic_0001>
module attributes {stable_mosaic.version = 11 : i64} {
  func.func @_probe_copy_kernel(%arg0: i32, %arg1: memref<8x128xf32, #tpu.memory_space<vmem>>, %arg2: memref<8x128xf32, #tpu.memory_space<vmem>>) attributes {dimension_semantics = [#tpu.dimension_semantics<arbitrary>], iteration_bounds = array<i64: 2>, scalar_prefetch = 0 : i64, scratch_operands = 0 : i64, tpu.core_type = #tpu.core_type<tc>, window_params = [{pipeline_mode = #tpu.pipeline_mode<synchronous>, transform_indices = @transform_0, window_bounds = array<i64: 8, 128>}, {transform_indices = @transform_1, window_bounds = array<i64: 8, 128>}]} {
    %c0 = arith.constant 0 : index
    %c0_0 = arith.constant 0 : index
    %0 = vector.load %arg1[%c0, %c0_0] : memref<8x128xf32, #tpu.memory_space<vmem>>, vector<8x128xf32>
    %c0_1 = arith.constant 0 : index
    %c0_2 = arith.constant 0 : index
    %1 = vector.load %arg2[%c0_1, %c0_2] : memref<8x128xf32, #tpu.memory_space<vmem>>, vector<8x128xf32>
    tpu.vector_store %arg2[%c0_1, %c0_2], %0 {strides = array<i32>} : memref<8x128xf32, #tpu.memory_space<vmem>>, vector<8x128xf32>,
    return
  }
  func.func @transform_0(%arg0: i32) -> (i32, i32) {
    %c0_i32 = arith.constant 0 : i32
    %c0_i32_0 = arith.constant 0 : i32
    %c0_i32_1 = arith.constant 0 : i32
    return %c0_i32, %c0_i32_0 : i32, i32
  }
  func.func @transform_1(%arg0: i32) -> (i32, i32) {
    %c0_i32 = arith.constant 0 : i32
    %c0_i32_0 = arith.constant 0 : i32
    return %arg0, %c0_i32 : i32, i32
  }
}

module attributes {stable_mosaic.version = 11 : i64} {
  func.func @_mha_kernel(%arg0: i32, %arg1: i32, %arg2: memref<1x8x32xbf16, #tpu.memory_space<vmem>>, %arg3: memref<1x8x32xbf16, #tpu.memory_space<vmem>>, %arg4: memref<2x32x16xbf16, #tpu.memory_space<vmem>>, %arg5: memref<2x1x16xf32, #tpu.memory_space<vmem>>, %arg6: memref<2x32x16xbf16, #tpu.memory_space<vmem>>, %arg7: memref<2x1x16xf32, #tpu.memory_space<vmem>>, %arg8: memref<2x32x16xbf16, #tpu.memory_space<vmem>>, %arg9: memref<2x1x16xf32, #tpu.memory_space<vmem>>, %arg10: memref<2x16x32xbf16, #tpu.memory_space<vmem>>, %arg11: memref<1x32xf32, #tpu.memory_space<vmem>>, %arg12: memref<1x32xf32, #tpu.memory_space<vmem>>, %arg13: memref<1x32xf32, #tpu.memory_space<vmem>>, %arg14: memref<1x8x32xbf16, #tpu.memory_space<vmem>>) attributes {dimension_semantics = [#tpu.dimension_semantics<parallel>, #tpu.dimension_semantics<parallel>], iteration_bounds = array<i64: 2, 1>, scalar_prefetch = 0 : i64, scratch_operands = 0 : i64, tpu.core_type = #tpu.core_type<tc>, window_params = [{transform_indices = @transform_0, window_bounds = array<i64: 1, 8, 32>}, {transform_indices = @transform_1, window_bounds = array<i64: 1, 8, 32>}, {pipeline_mode = #tpu.pipeline_mode<synchronous>, transform_indices = @transform_2, window_bounds = array<i64: 2, 32, 16>}, {pipeline_mode = #tpu.pipeline_mode<synchronous>, transform_indices = @transform_3, window_bounds = array<i64: 2, 1, 16>}, {pipeline_mode = #tpu.pipeline_mode<synchronous>, transform_indices = @transform_4, window_bounds = array<i64: 2, 32, 16>}, {pipeline_mode = #tpu.pipeline_mode<synchronous>, transform_indices = @transform_5, window_bounds = array<i64: 2, 1, 16>}, {pipeline_mode = #tpu.pipeline_mode<synchronous>, transform_indices = @transform_6, window_bounds = array<i64: 2, 32, 16>}, {pipeline_mode = #tpu.pipeline_mode<synchronous>, transform_indices = @transform_7, window_bounds = array<i64: 2, 1, 16>}, {pipeline_mode = #tpu.pipeline_mode<synchronous>, transform_indices = @transform_8, window_bounds = array<i64: 2, 16, 32>}, {pipeline_mode = #tpu.pipeline_mode<synchronous>, transform_indices = @transform_9, window_bounds = array<i64: 1, 32>}, {pipeline_mode = #tpu.pipeline_mode<synchronous>, transform_indices = @transform_10, window_bounds = array<i64: 1, 32>}, {pipeline_mode = #tpu.pipeline_mode<synchronous>, transform_indices = @transform_11, window_bounds = array<i64: 1, 32>}, {transform_indices = @transform_12, window_bounds = array<i64: 1, 8, 32>}]} {
    %c0 = arith.constant 0 : index
    %c0_0 = arith.constant 0 : index
    %c0_1 = arith.constant 0 : index
    %0 = vector.load %arg2[%c0, %c0_0, %c0_1] : memref<1x8x32xbf16, #tpu.memory_space<vmem>>, vector<1x8x32xbf16>
    %1 = vector.shape_cast %0 : vector<1x8x32xbf16> to vector<8x32xbf16>
    %c0_2 = arith.constant 0 : index
    %c0_3 = arith.constant 0 : index
    %c0_4 = arith.constant 0 : index
    %2 = vector.load %arg3[%c0_2, %c0_3, %c0_4] : memref<1x8x32xbf16, #tpu.memory_space<vmem>>, vector<1x8x32xbf16>
    %3 = vector.shape_cast %2 : vector<1x8x32xbf16> to vector<8x32xbf16>
    %4 = arith.extf %1 : vector<8x32xbf16> to vector<8x32xf32>
    %cst = arith.constant 0.000000e+00 : f32
    %5 = vector.broadcast %cst : f32 to vector<8x32xf32>
    %c0_5 = arith.constant 0 : index
    %c0_6 = arith.constant 0 : index
    %c0_7 = arith.constant 0 : index
    %6 = vector.load %arg4[%c0_5, %c0_6, %c0_7] : memref<2x32x16xbf16, #tpu.memory_space<vmem>>, vector<1x32x16xbf16>
    %7 = vector.shape_cast %6 : vector<1x32x16xbf16> to vector<32x16xbf16>
    %cst_8 = arith.constant dense<0.000000e+00> : vector<8x16xf32>
    %8 = tpu.matmul %1, %7, %cst_8 {dimension_numbers = #tpu.dot_dimension_numbers<[1], [0], [0], [1], [0, 0, 1, 1], [], []>} : vector<8x32xbf16>, vector<32x16xbf16>, vector<8x16xf32> -> vector<8x16xf32>
    %c0_9 = arith.constant 0 : index
    %c0_10 = arith.constant 0 : index
    %c0_11 = arith.constant 0 : index
    %9 = vector.load %arg5[%c0_9, %c0_10, %c0_11] : memref<2x1x16xf32, #tpu.memory_space<vmem>>, vector<1x1x16xf32>
    %10 = vector.shape_cast %9 : vector<1x1x16xf32> to vector<1x16xf32>
    %11 = vector.broadcast %10 : vector<1x16xf32> to vector<8x16xf32>
    %12 = arith.addf %8, %11 : vector<8x16xf32>
    %c0_12 = arith.constant 0 : index
    %c0_13 = arith.constant 0 : index
    %c0_14 = arith.constant 0 : index
    %13 = vector.load %arg6[%c0_12, %c0_13, %c0_14] : memref<2x32x16xbf16, #tpu.memory_space<vmem>>, vector<1x32x16xbf16>
    %14 = vector.shape_cast %13 : vector<1x32x16xbf16> to vector<32x16xbf16>
    %cst_15 = arith.constant dense<0.000000e+00> : vector<8x16xf32>
    %15 = tpu.matmul %3, %14, %cst_15 {dimension_numbers = #tpu.dot_dimension_numbers<[1], [0], [0], [1], [0, 0, 1, 1], [], []>} : vector<8x32xbf16>, vector<32x16xbf16>, vector<8x16xf32> -> vector<8x16xf32>
    %c0_16 = arith.constant 0 : index
    %c0_17 = arith.constant 0 : index
    %c0_18 = arith.constant 0 : index
    %16 = vector.load %arg7[%c0_16, %c0_17, %c0_18] : memref<2x1x16xf32, #tpu.memory_space<vmem>>, vector<1x1x16xf32>
    %17 = vector.shape_cast %16 : vector<1x1x16xf32> to vector<1x16xf32>
    %18 = vector.broadcast %17 : vector<1x16xf32> to vector<8x16xf32>
    %19 = arith.addf %15, %18 : vector<8x16xf32>
    %c0_19 = arith.constant 0 : index
    %c0_20 = arith.constant 0 : index
    %c0_21 = arith.constant 0 : index
    %20 = vector.load %arg8[%c0_19, %c0_20, %c0_21] : memref<2x32x16xbf16, #tpu.memory_space<vmem>>, vector<1x32x16xbf16>
    %21 = vector.shape_cast %20 : vector<1x32x16xbf16> to vector<32x16xbf16>
    %cst_22 = arith.constant dense<0.000000e+00> : vector<8x16xf32>
    %22 = tpu.matmul %3, %21, %cst_22 {dimension_numbers = #tpu.dot_dimension_numbers<[1], [0], [0], [1], [0, 0, 1, 1], [], []>} : vector<8x32xbf16>, vector<32x16xbf16>, vector<8x16xf32> -> vector<8x16xf32>
    %c0_23 = arith.constant 0 : index
    %c0_24 = arith.constant 0 : index
    %c0_25 = arith.constant 0 : index
    %23 = vector.load %arg9[%c0_23, %c0_24, %c0_25] : memref<2x1x16xf32, #tpu.memory_space<vmem>>, vector<1x1x16xf32>
    %24 = vector.shape_cast %23 : vector<1x1x16xf32> to vector<1x16xf32>
    %25 = vector.broadcast %24 : vector<1x16xf32> to vector<8x16xf32>
    %26 = arith.addf %22, %25 : vector<8x16xf32>
    %27 = arith.truncf %12 : vector<8x16xf32> to vector<8x16xbf16>
    %28 = arith.truncf %19 : vector<8x16xf32> to vector<8x16xbf16>
    %cst_26 = arith.constant dense<0.000000e+00> : vector<8x8xf32>
    %29 = tpu.matmul %27, %28, %cst_26 {dimension_numbers = #tpu.dot_dimension_numbers<[1], [1], [0], [0], [0, 0, 1, 0], [], []>} : vector<8x16xbf16>, vector<8x16xbf16>, vector<8x8xf32> -> vector<8x8xf32>
    %cst_27 = arith.constant dense<0xFF800000> : vector<8xf32>
    %30 = vector.multi_reduction <maximumf>, %29, %cst_27 [1] : vector<8x8xf32> to vector<8xf32>
    %31 = vector.shape_cast %30 : vector<8xf32> to vector<8x1xf32>
    %32 = vector.broadcast %31 : vector<8x1xf32> to vector<8x8xf32>
    %33 = arith.subf %29, %32 : vector<8x8xf32>
    %34 = math.exp %33 : vector<8x8xf32>
    %cst_28 = arith.constant dense<0.000000e+00> : vector<8xf32>
    %35 = vector.multi_reduction <add>, %34, %cst_28 [1] : vector<8x8xf32> to vector<8xf32>
    %36 = vector.shape_cast %35 : vector<8xf32> to vector<8x1xf32>
    %37 = arith.truncf %34 : vector<8x8xf32> to vector<8x8xbf16>
    %38 = arith.truncf %26 : vector<8x16xf32> to vector<8x16xbf16>
    %cst_29 = arith.constant dense<0.000000e+00> : vector<8x16xf32>
    %39 = tpu.matmul %37, %38, %cst_29 {dimension_numbers = #tpu.dot_dimension_numbers<[1], [0], [0], [1], [0, 0, 1, 1], [], []>} : vector<8x8xbf16>, vector<8x16xbf16>, vector<8x16xf32> -> vector<8x16xf32>
    %40 = tpu.reciprocal %36 {approx = true} : vector<8x1xf32> -> vector<8x1xf32>
    %41 = vector.broadcast %40 : vector<8x1xf32> to vector<8x16xf32>
    %42 = arith.mulf %39, %41 : vector<8x16xf32>
    %43 = arith.truncf %42 : vector<8x16xf32> to vector<8x16xbf16>
    %c0_30 = arith.constant 0 : index
    %c0_31 = arith.constant 0 : index
    %c0_32 = arith.constant 0 : index
    %44 = vector.load %arg10[%c0_30, %c0_31, %c0_32] : memref<2x16x32xbf16, #tpu.memory_space<vmem>>, vector<1x16x32xbf16>
    %45 = vector.shape_cast %44 : vector<1x16x32xbf16> to vector<16x32xbf16>
    %cst_33 = arith.constant dense<0.000000e+00> : vector<8x32xf32>
    %46 = tpu.matmul %43, %45, %cst_33 {dimension_numbers = #tpu.dot_dimension_numbers<[1], [0], [0], [1], [0, 0, 1, 1], [], []>} : vector<8x16xbf16>, vector<16x32xbf16>, vector<8x32xf32> -> vector<8x32xf32>
    %47 = arith.addf %5, %46 : vector<8x32xf32>
    %c1 = arith.constant 1 : index
    %c0_34 = arith.constant 0 : index
    %c0_35 = arith.constant 0 : index
    %48 = vector.load %arg4[%c1, %c0_34, %c0_35] : memref<2x32x16xbf16, #tpu.memory_space<vmem>>, vector<1x32x16xbf16>
    %49 = vector.shape_cast %48 : vector<1x32x16xbf16> to vector<32x16xbf16>
    %cst_36 = arith.constant dense<0.000000e+00> : vector<8x16xf32>
    %50 = tpu.matmul %1, %49, %cst_36 {dimension_numbers = #tpu.dot_dimension_numbers<[1], [0], [0], [1], [0, 0, 1, 1], [], []>} : vector<8x32xbf16>, vector<32x16xbf16>, vector<8x16xf32> -> vector<8x16xf32>
    %c1_37 = arith.constant 1 : index
    %c0_38 = arith.constant 0 : index
    %c0_39 = arith.constant 0 : index
    %51 = vector.load %arg5[%c1_37, %c0_38, %c0_39] : memref<2x1x16xf32, #tpu.memory_space<vmem>>, vector<1x1x16xf32>
    %52 = vector.shape_cast %51 : vector<1x1x16xf32> to vector<1x16xf32>
    %53 = vector.broadcast %52 : vector<1x16xf32> to vector<8x16xf32>
    %54 = arith.addf %50, %53 : vector<8x16xf32>
    %c1_40 = arith.constant 1 : index
    %c0_41 = arith.constant 0 : index
    %c0_42 = arith.constant 0 : index
    %55 = vector.load %arg6[%c1_40, %c0_41, %c0_42] : memref<2x32x16xbf16, #tpu.memory_space<vmem>>, vector<1x32x16xbf16>
    %56 = vector.shape_cast %55 : vector<1x32x16xbf16> to vector<32x16xbf16>
    %cst_43 = arith.constant dense<0.000000e+00> : vector<8x16xf32>
    %57 = tpu.matmul %3, %56, %cst_43 {dimension_numbers = #tpu.dot_dimension_numbers<[1], [0], [0], [1], [0, 0, 1, 1], [], []>} : vector<8x32xbf16>, vector<32x16xbf16>, vector<8x16xf32> -> vector<8x16xf32>
    %c1_44 = arith.constant 1 : index
    %c0_45 = arith.constant 0 : index
    %c0_46 = arith.constant 0 : index
    %58 = vector.load %arg7[%c1_44, %c0_45, %c0_46] : memref<2x1x16xf32, #tpu.memory_space<vmem>>, vector<1x1x16xf32>
    %59 = vector.shape_cast %58 : vector<1x1x16xf32> to vector<1x16xf32>
    %60 = vector.broadcast %59 : vector<1x16xf32> to vector<8x16xf32>
    %61 = arith.addf %57, %60 : vector<8x16xf32>
    %c1_47 = arith.constant 1 : index
    %c0_48 = arith.constant 0 : index
    %c0_49 = arith.constant 0 : index
    %62 = vector.load %arg8[%c1_47, %c0_48, %c0_49] : memref<2x32x16xbf16, #tpu.memory_space<vmem>>, vector<1x32x16xbf16>
    %63 = vector.shape_cast %62 : vector<1x32x16xbf16> to vector<32x16xbf16>
    %cst_50 = arith.constant dense<0.000000e+00> : vector<8x16xf32>
    %64 = tpu.matmul %3, %63, %cst_50 {dimension_numbers = #tpu.dot_dimension_numbers<[1], [0], [0], [1], [0, 0, 1, 1], [], []>} : vector<8x32xbf16>, vector<32x16xbf16>, vector<8x16xf32> -> vector<8x16xf32>
    %c1_51 = arith.constant 1 : index
    %c0_52 = arith.constant 0 : index
    %c0_53 = arith.constant 0 : index
    %65 = vector.load %arg9[%c1_51, %c0_52, %c0_53] : memref<2x1x16xf32, #tpu.memory_space<vmem>>, vector<1x1x16xf32>
    %66 = vector.shape_cast %65 : vector<1x1x16xf32> to vector<1x16xf32>
    %67 = vector.broadcast %66 : vector<1x16xf32> to vector<8x16xf32>
    %68 = arith.addf %64, %67 : vector<8x16xf32>
    %69 = arith.truncf %54 : vector<8x16xf32> to vector<8x16xbf16>
    %70 = arith.truncf %61 : vector<8x16xf32> to vector<8x16xbf16>
    %cst_54 = arith.constant dense<0.000000e+00> : vector<8x8xf32>
    %71 = tpu.matmul %69, %70, %cst_54 {dimension_numbers = #tpu.dot_dimension_numbers<[1], [1], [0], [0], [0, 0, 1, 0], [], []>} : vector<8x16xbf16>, vector<8x16xbf16>, vector<8x8xf32> -> vector<8x8xf32>
    %cst_55 = arith.constant dense<0xFF800000> : vector<8xf32>
    %72 = vector.multi_reduction <maximumf>, %71, %cst_55 [1] : vector<8x8xf32> to vector<8xf32>
    %73 = vector.shape_cast %72 : vector<8xf32> to vector<8x1xf32>
    %74 = vector.broadcast %73 : vector<8x1xf32> to vector<8x8xf32>
    %75 = arith.subf %71, %74 : vector<8x8xf32>
    %76 = math.exp %75 : vector<8x8xf32>
    %cst_56 = arith.constant dense<0.000000e+00> : vector<8xf32>
    %77 = vector.multi_reduction <add>, %76, %cst_56 [1] : vector<8x8xf32> to vector<8xf32>
    %78 = vector.shape_cast %77 : vector<8xf32> to vector<8x1xf32>
    %79 = arith.truncf %76 : vector<8x8xf32> to vector<8x8xbf16>
    %80 = arith.truncf %68 : vector<8x16xf32> to vector<8x16xbf16>
    %cst_57 = arith.constant dense<0.000000e+00> : vector<8x16xf32>
    %81 = tpu.matmul %79, %80, %cst_57 {dimension_numbers = #tpu.dot_dimension_numbers<[1], [0], [0], [1], [0, 0, 1, 1], [], []>} : vector<8x8xbf16>, vector<8x16xbf16>, vector<8x16xf32> -> vector<8x16xf32>
    %82 = tpu.reciprocal %78 {approx = true} : vector<8x1xf32> -> vector<8x1xf32>
    %83 = vector.broadcast %82 : vector<8x1xf32> to vector<8x16xf32>
    %84 = arith.mulf %81, %83 : vector<8x16xf32>
    %85 = arith.truncf %84 : vector<8x16xf32> to vector<8x16xbf16>
    %c1_58 = arith.constant 1 : index
    %c0_59 = arith.constant 0 : index
    %c0_60 = arith.constant 0 : index
    %86 = vector.load %arg10[%c1_58, %c0_59, %c0_60] : memref<2x16x32xbf16, #tpu.memory_space<vmem>>, vector<1x16x32xbf16>
    %87 = vector.shape_cast %86 : vector<1x16x32xbf16> to vector<16x32xbf16>
    %cst_61 = arith.constant dense<0.000000e+00> : vector<8x32xf32>
    %88 = tpu.matmul %85, %87, %cst_61 {dimension_numbers = #tpu.dot_dimension_numbers<[1], [0], [0], [1], [0, 0, 1, 1], [], []>} : vector<8x16xbf16>, vector<16x32xbf16>, vector<8x32xf32> -> vector<8x32xf32>
    %89 = arith.addf %47, %88 : vector<8x32xf32>
    %c0_62 = arith.constant 0 : index
    %c0_63 = arith.constant 0 : index
    %90 = vector.load %arg11[%c0_62, %c0_63] : memref<1x32xf32, #tpu.memory_space<vmem>>, vector<1x32xf32>
    %91 = vector.broadcast %90 : vector<1x32xf32> to vector<8x32xf32>
    %92 = arith.addf %89, %91 : vector<8x32xf32>
    %93 = arith.addf %92, %4 : vector<8x32xf32>
    %c0_64 = arith.constant 0 : index
    %c0_65 = arith.constant 0 : index
    %94 = vector.load %arg12[%c0_64, %c0_65] : memref<1x32xf32, #tpu.memory_space<vmem>>, vector<1x32xf32>
    %c0_66 = arith.constant 0 : index
    %c0_67 = arith.constant 0 : index
    %95 = vector.load %arg13[%c0_66, %c0_67] : memref<1x32xf32, #tpu.memory_space<vmem>>, vector<1x32xf32>
    %cst_68 = arith.constant dense<0.000000e+00> : vector<8xf32>
    %96 = vector.multi_reduction <add>, %93, %cst_68 [1] : vector<8x32xf32> to vector<8xf32>
    %97 = vector.shape_cast %96 : vector<8xf32> to vector<8x1xf32>
    %cst_69 = arith.constant 3.200000e+01 : f32
    %98 = vector.broadcast %cst_69 : f32 to vector<8x1xf32>
    %99 = arith.divf %97, %98 : vector<8x1xf32>
    %100 = vector.broadcast %99 : vector<8x1xf32> to vector<8x32xf32>
    %101 = arith.subf %93, %100 : vector<8x32xf32>
    %102 = arith.mulf %101, %101 : vector<8x32xf32>
    %cst_70 = arith.constant dense<0.000000e+00> : vector<8xf32>
    %103 = vector.multi_reduction <add>, %102, %cst_70 [1] : vector<8x32xf32> to vector<8xf32>
    %104 = vector.shape_cast %103 : vector<8xf32> to vector<8x1xf32>
    %cst_71 = arith.constant 3.200000e+01 : f32
    %105 = vector.broadcast %cst_71 : f32 to vector<8x1xf32>
    %106 = arith.divf %104, %105 : vector<8x1xf32>
    %cst_72 = arith.constant 9.99999974E-6 : f32
    %107 = vector.broadcast %cst_72 : f32 to vector<8x1xf32>
    %108 = arith.addf %106, %107 : vector<8x1xf32>
    %109 = math.rsqrt %108 : vector<8x1xf32>
    %110 = vector.broadcast %99 : vector<8x1xf32> to vector<8x32xf32>
    %111 = arith.subf %93, %110 : vector<8x32xf32>
    %112 = vector.broadcast %109 : vector<8x1xf32> to vector<8x32xf32>
    %113 = arith.mulf %111, %112 : vector<8x32xf32>
    %114 = vector.broadcast %94 : vector<1x32xf32> to vector<8x32xf32>
    %115 = arith.mulf %113, %114 : vector<8x32xf32>
    %116 = vector.broadcast %95 : vector<1x32xf32> to vector<8x32xf32>
    %117 = arith.addf %115, %116 : vector<8x32xf32>
    %118 = arith.truncf %117 : vector<8x32xf32> to vector<8x32xbf16>
    %c0_73 = arith.constant 0 : index
    %c0_74 = arith.constant 0 : index
    %c0_75 = arith.constant 0 : index
    %119 = vector.load %arg14[%c0_73, %c0_74, %c0_75] : memref<1x8x32xbf16, #tpu.memory_space<vmem>>, vector<1x8x32xbf16>
    %120 = vector.shape_cast %119 : vector<1x8x32xbf16> to vector<8x32xbf16>
    %121 = vector.shape_cast %118 : vector<8x32xbf16> to vector<1x8x32xbf16>
    tpu.vector_store %arg14[%c0_73, %c0_74, %c0_75], %121 {strides = array<i32>} : memref<1x8x32xbf16, #tpu.memory_space<vmem>>, vector<1x8x32xbf16>,
    return
  }
  func.func @transform_0(%arg0: i32, %arg1: i32) -> (i32, i32, i32) {
    %c0_i32 = arith.constant 0 : i32
    %c0_i32_0 = arith.constant 0 : i32
    return %arg0, %arg1, %c0_i32 : i32, i32, i32
  }
  func.func @transform_1(%arg0: i32, %arg1: i32) -> (i32, i32, i32) {
    %c0_i32 = arith.constant 0 : i32
    %c0_i32_0 = arith.constant 0 : i32
    %c0_i32_1 = arith.constant 0 : i32
    return %arg0, %c0_i32, %c0_i32_0 : i32, i32, i32
  }
  func.func @transform_2(%arg0: i32, %arg1: i32) -> (i32, i32, i32) {
    %c0_i32 = arith.constant 0 : i32
    %c0_i32_0 = arith.constant 0 : i32
    %c0_i32_1 = arith.constant 0 : i32
    %c0_i32_2 = arith.constant 0 : i32
    return %c0_i32, %c0_i32_0, %c0_i32_1 : i32, i32, i32
  }
  func.func @transform_3(%arg0: i32, %arg1: i32) -> (i32, i32, i32) {
    %c0_i32 = arith.constant 0 : i32
    %c0_i32_0 = arith.constant 0 : i32
    %c0_i32_1 = arith.constant 0 : i32
    %c0_i32_2 = arith.constant 0 : i32
    return %c0_i32, %c0_i32_0, %c0_i32_1 : i32, i32, i32
  }
  func.func @transform_4(%arg0: i32, %arg1: i32) -> (i32, i32, i32) {
    %c0_i32 = arith.constant 0 : i32
    %c0_i32_0 = arith.constant 0 : i32
    %c0_i32_1 = arith.constant 0 : i32
    %c0_i32_2 = arith.constant 0 : i32
    return %c0_i32, %c0_i32_0, %c0_i32_1 : i32, i32, i32
  }
  func.func @transform_5(%arg0: i32, %arg1: i32) -> (i32, i32, i32) {
    %c0_i32 = arith.constant 0 : i32
    %c0_i32_0 = arith.constant 0 : i32
    %c0_i32_1 = arith.constant 0 : i32
    %c0_i32_2 = arith.constant 0 : i32
    return %c0_i32, %c0_i32_0, %c0_i32_1 : i32, i32, i32
  }
  func.func @transform_6(%arg0: i32, %arg1: i32) -> (i32, i32, i32) {
    %c0_i32 = arith.constant 0 : i32
    %c0_i32_0 = arith.constant 0 : i32
    %c0_i32_1 = arith.constant 0 : i32
    %c0_i32_2 = arith.constant 0 : i32
    return %c0_i32, %c0_i32_0, %c0_i32_1 : i32, i32, i32
  }
  func.func @transform_7(%arg0: i32, %arg1: i32) -> (i32, i32, i32) {
    %c0_i32 = arith.constant 0 : i32
    %c0_i32_0 = arith.constant 0 : i32
    %c0_i32_1 = arith.constant 0 : i32
    %c0_i32_2 = arith.constant 0 : i32
    return %c0_i32, %c0_i32_0, %c0_i32_1 : i32, i32, i32
  }
  func.func @transform_8(%arg0: i32, %arg1: i32) -> (i32, i32, i32) {
    %c0_i32 = arith.constant 0 : i32
    %c0_i32_0 = arith.constant 0 : i32
    %c0_i32_1 = arith.constant 0 : i32
    %c0_i32_2 = arith.constant 0 : i32
    return %c0_i32, %c0_i32_0, %c0_i32_1 : i32, i32, i32
  }
  func.func @transform_9(%arg0: i32, %arg1: i32) -> (i32, i32) {
    %c0_i32 = arith.constant 0 : i32
    %c0_i32_0 = arith.constant 0 : i32
    %c0_i32_1 = arith.constant 0 : i32
    return %c0_i32, %c0_i32_0 : i32, i32
  }
  func.func @transform_10(%arg0: i32, %arg1: i32) -> (i32, i32) {
    %c0_i32 = arith.constant 0 : i32
    %c0_i32_0 = arith.constant 0 : i32
    %c0_i32_1 = arith.constant 0 : i32
    return %c0_i32, %c0_i32_0 : i32, i32
  }
  func.func @transform_11(%arg0: i32, %arg1: i32) -> (i32, i32) {
    %c0_i32 = arith.constant 0 : i32
    %c0_i32_0 = arith.constant 0 : i32
    %c0_i32_1 = arith.constant 0 : i32
    return %c0_i32, %c0_i32_0 : i32, i32
  }
  func.func @transform_12(%arg0: i32, %arg1: i32) -> (i32, i32, i32) {
    %c0_i32 = arith.constant 0 : i32
    %c0_i32_0 = arith.constant 0 : i32
    return %arg0, %arg1, %c0_i32 : i32, i32, i32
  }
}

</mosaic_0001>

<llo_original>
// kernel: tpu_custom_call.1
$region0: #{tpu_custom_call.1}
  #allocation0 [shape = 'u32[]', space=smem, size = 0x4, offset = 0x4, fixed_abs, tag = 'smem constant byte address 0x4 - core index']
  #allocation1 [shape = 'u32[144,128]{1,0:T(1,128)}', space=vmem, size = 0x12000, scoped, tag = 'internal scratch']
  %s0 = inlined_call_operand.hbm [shape: f32[8,128], index: 0, kind: input, shape index: {}]
  %s1 = inlined_call_operand.hbm [shape: f32[16,128], index: 1, kind: output, shape index: {}]
  %s2 = sld [smem:[#allocation0]]
  $region41: #{tpu_custom_call.1} parent=0
    _
  %s4 = ssub.s32 1, %s2
  %s5 = scalar_select 0, %s4, %s2
  $region1: #{tpu_custom_call.1} parent=0
    #allocation2 [shape = 'u8[4096]{0}', space=vmem, size = 0x1000, scoped, tag = 'input window, operand 0, single buffered']
    #allocation3 [shape = 's32[2]{0}', space=sflag, size = 0x8, scoped, tag = 'scoped memory for tpu_custom_call.1']
    #allocation4 [shape = 's32[2]{0}', space=sflag, size = 0x8, scoped, tag = 'scoped memory for tpu_custom_call.1']
    #allocation5 [shape = 'u8[8192]{0}', space=vmem, size = 0x2000, scoped, tag = 'output window, operand 0']
    %6 = vsyncpa [#allocation3], 0
    %7 = vsyncpa [#allocation4], 0
    %s8 = scalar_lea.sflag [#allocation4], 1
    %9 = vsyncpa %s8, 0
    loop: start=0, step=1, limit=4
    $region2: #{tpu_custom_call.1} parent=1 // loop_pre_header
      _
    $region3: #{tpu_custom_call.1} parent=1 // loop_header
      %s11 = sphi 0, %s15
      %p12 = scmp.ge.s32.totalorder %s11, 4
      %s19 = sphi 0, %s19
      %s21 = sphi 0, %s19
      %s22 = sphi 0, %s21
      %s36 = sphi 0, %s22
      %s42 = sphi 0, %s44
      %s45 = sphi 0, %s42
      %s46 = sphi 0, %s45
      %s62 = sphi 0, %s46
    $region4: #{tpu_custom_call.1} parent=1 // loop_header_branch
      %14 = sbr.rel (%p12) target = $region8
    $region5: #{tpu_custom_call.1} parent=1 // loop_body
      %s16 = ssub.s32 %s11, 1
      %s17 = ssub.s32 %s11, 2
      %s18 = sadd.s32 %s11, 1
      %s20 = sadd.s32 %s19, 1
      %p23 = scmp.eq.s32.totalorder %s11, 1
      %p24 = scmp.ne.s32.totalorder %s19, %s21
      %p25 = scmp.eq.s32.totalorder %s11, 0
      %p26 = por %p24, %p25
      %p27 = scmp.ne.s32.totalorder %s19, %s21
      %p28 = scmp.eq.s32.totalorder %s16, 1
      %p29 = por %p27, %p28
      %p30 = scmp.ne.s32.totalorder %s21, %s22
      %p31 = scmp.eq.s32.totalorder %s16, 0
      %p32 = por %p30, %p31
      %p33 = scmp.ne.s32.totalorder %s21, %s22
      %p34 = scmp.eq.s32.totalorder %s17, 1
      %p35 = por %p33, %p34
      %p37 = scmp.ne.s32.totalorder %s22, %s36
      %p38 = scmp.eq.s32.totalorder %s17, 0
      %p39 = por %p37, %p38
      %s40 = ssub.s32 %s11, %s18
      %p41 = scmp.eq.s32.totalorder %s40, 0
      %s43 = sadd.s32 %s42, 1
      %s44 = scalar_select %p41, %s42, %s43
      %p47 = pneg %p41
      %p48 = scmp.eq.s32.totalorder %s11, 1
      %p49 = por %p47, %p48
      %p50 = scmp.ne.s32.totalorder %s42, %s45
      %p51 = scmp.eq.s32.totalorder %s11, 0
      %p52 = por %p50, %p51
      %p53 = scmp.ne.s32.totalorder %s42, %s45
      %p54 = scmp.eq.s32.totalorder %s16, 1
      %p55 = por %p53, %p54
      %p56 = scmp.ne.s32.totalorder %s45, %s46
      %p57 = scmp.eq.s32.totalorder %s16, 0
      %p58 = por %p56, %p57
      %p59 = scmp.ne.s32.totalorder %s45, %s46
      %p60 = scmp.eq.s32.totalorder %s17, 1
      %p61 = por %p59, %p60
      %p63 = scmp.ne.s32.totalorder %s46, %s62
      %p64 = scmp.eq.s32.totalorder %s17, 0
      %p65 = por %p63, %p64
      %p66 = scmp.le.s32.totalorder 1, %s11
      %p67 = scmp.lt.s32.totalorder %s11, 3
      %p68 = pnand %p66, %p67
      %p69 = pneg %p68
      // Predicated region
      $region9: #{tpu_custom_call.1} parent=5 // pred_check
        _
      $region10: #{tpu_custom_call.1} parent=5 // pred_check_branch
        %71 = sbr.rel (%p68) target = $region12
      $region11: #{tpu_custom_call.1} parent=5 // pred_region
        %s72 = ssub.s32 %s11, 1
        // Predicated region
        $region13: #{tpu_custom_call.1} parent=11 // pred_check
          %p73 = pneg %p32
        $region14: #{tpu_custom_call.1} parent=11 // pred_check_branch
          %75 = sbr.rel (%p73) target = $region16
        $region15: #{tpu_custom_call.1} parent=11 // pred_region
          %s77 = ssub.s32 128, 128
          %78 = vsyncadd [#allocation3], %s77
          %s80 = sshll.u32 [#allocation2], 4
          %s81 = int_to_ptr.vmem [resolvable:$true] %s80
          %83 = dma.hbm_to_vmem [thread:$0]  %s0, 128, %s81, [#allocation3]
        $region16: #{tpu_custom_call.1} parent=11 // pred_fallthru
          _
      $region12: #{tpu_custom_call.1} parent=5 // pred_fallthru
        _
      %p84 = scmp.lt.s32.totalorder %s11, 2
      // Predicated region
      $region17: #{tpu_custom_call.1} parent=5 // pred_check
        %p85 = pneg %p84
      $region18: #{tpu_custom_call.1} parent=5 // pred_check_branch
        %87 = sbr.rel (%p85) target = $region20
      $region19: #{tpu_custom_call.1} parent=5 // pred_region
        _
      $region20: #{tpu_custom_call.1} parent=5 // pred_fallthru
        _
      %p88 = scmp.le.s32.totalorder 1, %s11
      %p89 = scmp.lt.s32.totalorder %s11, 3
      %p90 = pnand %p88, %p89
      %p91 = pneg %p90
      // Predicated region
      $region21: #{tpu_custom_call.1} parent=5 // pred_check
        _
      $region22: #{tpu_custom_call.1} parent=5 // pred_check_branch
        %93 = sbr.rel (%p90) target = $region24
      $region23: #{tpu_custom_call.1} parent=5 // pred_region
        %s94 = ssub.s32 %s11, 1
        // Predicated region
        $region25: #{tpu_custom_call.1} parent=23 // pred_check
          %p95 = pneg %p32
        $region26: #{tpu_custom_call.1} parent=23 // pred_check_branch
          %97 = sbr.rel (%p95) target = $region28
        $region27: #{tpu_custom_call.1} parent=23 // pred_region
          %98 = dma.done [#allocation3], 128
        $region28: #{tpu_custom_call.1} parent=23 // pred_fallthru
          _
        %p99 = pneg %p32
        %p100 = pneg %p29
        %p101 = pneg %p58
        %p102 = pneg %p55
        %s103 = sand.u32 %s45, 1
        %s104 = scalar_lea.sflag [#allocation4], %s103
        %s105 = sand.u32 %s45, 1
        %s106 = smul.addr %s105, 8
        %s107 = scalar_lea.vmem [#allocation5], %s106
        %v108 = vld [vmem:[#allocation2] sm:$0xff]
        %109 = vst [vmem:[%s107] sm:$0xff] %v108
        %s110 = sand.u32 %s45, 1
        %s111 = scalar_lea.sflag [#allocation4], %s110
        %s112 = sand.u32 %s45, 1
        %s113 = smul.addr %s112, 8
        %s114 = scalar_lea.vmem [#allocation5], %s113
        // Predicated region
        $region29: #{tpu_custom_call.1} parent=23 // pred_check
          %p115 = pneg %p55
        $region30: #{tpu_custom_call.1} parent=23 // pred_check_branch
          %117 = sbr.rel (%p115) target = $region32
        $region31: #{tpu_custom_call.1} parent=23 // pred_region
          %s119 = ssub.s32 128, 128
          %120 = vsyncadd %s111, %s119
          %s121 = smul.addr %s16, 128
          %s122 = scalar_lea.hbm %s1, %s121
          %s124 = sshll.u32 %s114, 4
          %s125 = int_to_ptr.vmem [resolvable:$true] %s124
          %127 = dma.vmem_to_hbm [thread:$0]  %s125, 128, %s122, %s111
        $region32: #{tpu_custom_call.1} parent=23 // pred_fallthru
          _
      $region24: #{tpu_custom_call.1} parent=5 // pred_fallthru
        _
      %p128 = scmp.le.s32.totalorder 2, %s11
      // Predicated region
      $region33: #{tpu_custom_call.1} parent=5 // pred_check
        %p129 = pneg %p128
      $region34: #{tpu_custom_call.1} parent=5 // pred_check_branch
        %131 = sbr.rel (%p129) target = $region36
      $region35: #{tpu_custom_call.1} parent=5 // pred_region
        %s132 = ssub.s32 %s11, 2
        // Predicated region
        $region37: #{tpu_custom_call.1} parent=35 // pred_check
          %p133 = pneg %p61
        $region38: #{tpu_custom_call.1} parent=35 // pred_check_branch
          %135 = sbr.rel (%p133) target = $region40
        $region39: #{tpu_custom_call.1} parent=35 // pred_region
          %s136 = sand.u32 %s46, 1
          %s137 = scalar_lea.sflag [#allocation4], %s136
          %s138 = sand.u32 %s46, 1
          %s139 = smul.addr %s138, 8
          %s140 = scalar_lea.vmem [#allocation5], %s139
          %141 = dma.done %s137, 128
        $region40: #{tpu_custom_call.1} parent=35 // pred_fallthru
          _
      $region36: #{tpu_custom_call.1} parent=5 // pred_fallthru
        _
    $region6: #{tpu_custom_call.1} parent=1 // loop_footer
      %s15 = sadd.s32 1, %s11
    $region7: #{tpu_custom_call.1} parent=1 // loop_footer_branch
      %10 = sbr.rel target = $region3
    $region8: #{tpu_custom_call.1} parent=1 // loop_exit
      _
    %142 = vsyncpa [#allocation3], 1
    %s143 = scalar_lea.sflag [#allocation3], 1
    %144 = vsyncpa %s143, 1
    %145 = vsyncpa [#allocation4], 1
    %s146 = scalar_lea.sflag [#allocation4], 1
    %147 = vsyncpa %s146, 1

// kernel: tpu_custom_call.1
$region0: #{tpu_custom_call.1}
  #allocation0 [shape = 'u32[]', space=smem, size = 0x4, offset = 0x4, fixed_abs, tag = 'smem constant byte address 0x4 - core index']
  #allocation1 [shape = 'u32[144,128]{1,0:T(1,128)}', space=vmem, size = 0x12000, scoped, tag = 'internal scratch']
  %s0 = inlined_call_operand.vmem [shape: bf16[2,8,32], index: 0, kind: input, shape index: {}]
  %s1 = inlined_call_operand.vmem [shape: bf16[2,8,32], index: 1, kind: input, shape index: {}]
  %s2 = inlined_call_operand.vmem [shape: bf16[2,32,16], index: 2, kind: input, shape index: {}]
  %s3 = inlined_call_operand.vmem [shape: f32[2,1,16], index: 3, kind: input, shape index: {}]
  %s4 = inlined_call_operand.vmem [shape: bf16[2,32,16], index: 4, kind: input, shape index: {}]
  %s5 = inlined_call_operand.vmem [shape: f32[2,1,16], index: 5, kind: input, shape index: {}]
  %s6 = inlined_call_operand.vmem [shape: bf16[2,32,16], index: 6, kind: input, shape index: {}]
  %s7 = inlined_call_operand.vmem [shape: f32[2,1,16], index: 7, kind: input, shape index: {}]
  %s8 = inlined_call_operand.vmem [shape: bf16[2,16,32], index: 8, kind: input, shape index: {}]
  %s9 = inlined_call_operand.vmem [shape: f32[1,32], index: 9, kind: input, shape index: {}]
  %s10 = inlined_call_operand.vmem [shape: f32[1,32], index: 10, kind: input, shape index: {}]
  %s11 = inlined_call_operand.vmem [shape: f32[1,32], index: 11, kind: input, shape index: {}]
  %s12 = inlined_call_operand.hbm [shape: bf16[2,8,32], index: 12, kind: output, shape index: {}]
  %s13 = sld [smem:[#allocation0]]
  $region81: #{tpu_custom_call.1} parent=0
    _
  %s15 = ssub.s32 1, %s13
  %s16 = scalar_select 0, %s15, %s13
  $region1: #{tpu_custom_call.1} parent=0
    #allocation2 [shape = 'u8[4096]{0}', space=vmem, size = 0x1000, scoped, tag = 'output window, operand 0']
    #allocation3 [shape = 's32[2]{0}', space=sflag, size = 0x8, scoped, tag = 'scoped memory for tpu_custom_call.1']
    %17 = vsyncpa [#allocation3], 0
    %s18 = scalar_lea.sflag [#allocation3], 1
    %19 = vsyncpa %s18, 0
    loop: start=0, step=1, limit=4
    $region2: #{tpu_custom_call.1} parent=1 // loop_pre_header
      _
    $region3: #{tpu_custom_call.1} parent=1 // loop_header
      %s21 = sphi 0, %s25
      %p22 = scmp.ge.s32.totalorder %s21, 4
      %s28 = sphi 0, %s40
      %s29 = sphi 0, %s36
      %s30 = sphi 0, %s28
      %s31 = sphi 0, %s29
      %s32 = sphi 0, %s30
      %s33 = sphi 0, %s31
      %s45 = sphi 0, %s47
      %s48 = sphi 0, %s45
      %s49 = sphi 0, %s48
      %s65 = sphi 0, %s49
      %s71 = sphi 0, %s73
      %s74 = sphi 0, %s71
      %s75 = sphi 0, %s74
      %s91 = sphi 0, %s75
      %s95 = sphi 0, %s95
      %s97 = sphi 0, %s95
      %s98 = sphi 0, %s97
      %s112 = sphi 0, %s98
      %s116 = sphi 0, %s116
      %s118 = sphi 0, %s116
      %s119 = sphi 0, %s118
      %s133 = sphi 0, %s119
      %s137 = sphi 0, %s137
      %s139 = sphi 0, %s137
      %s140 = sphi 0, %s139
      %s154 = sphi 0, %s140
      %s158 = sphi 0, %s158
      %s160 = sphi 0, %s158
      %s161 = sphi 0, %s160
      %s175 = sphi 0, %s161
      %s179 = sphi 0, %s179
      %s181 = sphi 0, %s179
      %s182 = sphi 0, %s181
      %s196 = sphi 0, %s182
      %s200 = sphi 0, %s200
      %s202 = sphi 0, %s200
      %s203 = sphi 0, %s202
      %s217 = sphi 0, %s203
      %s221 = sphi 0, %s221
      %s223 = sphi 0, %s221
      %s224 = sphi 0, %s223
      %s238 = sphi 0, %s224
      %s242 = sphi 0, %s242
      %s244 = sphi 0, %s242
      %s245 = sphi 0, %s244
      %s259 = sphi 0, %s245
      %s263 = sphi 0, %s263
      %s265 = sphi 0, %s263
      %s266 = sphi 0, %s265
      %s280 = sphi 0, %s266
      %s284 = sphi 0, %s284
      %s286 = sphi 0, %s284
      %s287 = sphi 0, %s286
      %s301 = sphi 0, %s287
      %s309 = sphi 0, %s311
      %s312 = sphi 0, %s309
      %s313 = sphi 0, %s312
      %s329 = sphi 0, %s313
    $region4: #{tpu_custom_call.1} parent=1 // loop_header_branch
      %24 = sbr.rel (%p22) target = $region8
    $region5: #{tpu_custom_call.1} parent=1 // loop_body
      %s26 = ssub.s32 %s21, 1
      %s27 = ssub.s32 %s21, 2
      %s34 = sadd.s32 1, %s29
      %p35 = scmp.ge.s32.totalorder %s34, 1
      %s36 = scalar_select %p35, 0, %s34
      %s37 = sadd.s32 1, %s28
      %s38 = scalar_select %p35, %s37, %s28
      %p39 = scmp.ge.s32.totalorder %s38, 2
      %s40 = scalar_select %p39, 0, %s38
      %s41 = ssub.s32 %s28, %s40
      %s42 = ssub.s32 %s29, %s36
      %s43 = sor.u32 %s41, %s42
      %p44 = scmp.eq.s32.totalorder %s43, 0
      %s46 = sadd.s32 %s45, 1
      %s47 = scalar_select %p44, %s45, %s46
      %p50 = pneg %p44
      %p51 = scmp.eq.s32.totalorder %s21, 1
      %p52 = por %p50, %p51
      %p53 = scmp.ne.s32.totalorder %s45, %s48
      %p54 = scmp.eq.s32.totalorder %s21, 0
      %p55 = por %p53, %p54
      %p56 = scmp.ne.s32.totalorder %s45, %s48
      %p57 = scmp.eq.s32.totalorder %s26, 1
      %p58 = por %p56, %p57
      %p59 = scmp.ne.s32.totalorder %s48, %s49
      %p60 = scmp.eq.s32.totalorder %s26, 0
      %p61 = por %p59, %p60
      %p62 = scmp.ne.s32.totalorder %s48, %s49
      %p63 = scmp.eq.s32.totalorder %s27, 1
      %p64 = por %p62, %p63
      %p66 = scmp.ne.s32.totalorder %s49, %s65
      %p67 = scmp.eq.s32.totalorder %s27, 0
      %p68 = por %p66, %p67
      %s69 = ssub.s32 %s28, %s40
      %p70 = scmp.eq.s32.totalorder %s69, 0
      %s72 = sadd.s32 %s71, 1
      %s73 = scalar_select %p70, %s71, %s72
      %p76 = pneg %p70
      %p77 = scmp.eq.s32.totalorder %s21, 1
      %p78 = por %p76, %p77
      %p79 = scmp.ne.s32.totalorder %s71, %s74
      %p80 = scmp.eq.s32.totalorder %s21, 0
      %p81 = por %p79, %p80
      %p82 = scmp.ne.s32.totalorder %s71, %s74
      %p83 = scmp.eq.s32.totalorder %s26, 1
      %p84 = por %p82, %p83
      %p85 = scmp.ne.s32.totalorder %s74, %s75
      %p86 = scmp.eq.s32.totalorder %s26, 0
      %p87 = por %p85, %p86
      %p88 = scmp.ne.s32.totalorder %s74, %s75
      %p89 = scmp.eq.s32.totalorder %s27, 1
      %p90 = por %p88, %p89
      %p92 = scmp.ne.s32.totalorder %s75, %s91
      %p93 = scmp.eq.s32.totalorder %s27, 0
      %p94 = por %p92, %p93
      %s96 = sadd.s32 %s95, 1
      %p99 = scmp.eq.s32.totalorder %s21, 1
      %p100 = scmp.ne.s32.totalorder %s95, %s97
      %p101 = scmp.eq.s32.totalorder %s21, 0
      %p102 = por %p100, %p101
      %p103 = scmp.ne.s32.totalorder %s95, %s97
      %p104 = scmp.eq.s32.totalorder %s26, 1
      %p105 = por %p103, %p104
      %p106 = scmp.ne.s32.totalorder %s97, %s98
      %p107 = scmp.eq.s32.totalorder %s26, 0
      %p108 = por %p106, %p107
      %p109 = scmp.ne.s32.totalorder %s97, %s98
      %p110 = scmp.eq.s32.totalorder %s27, 1
      %p111 = por %p109, %p110
      %p113 = scmp.ne.s32.totalorder %s98, %s112
      %p114 = scmp.eq.s32.totalorder %s27, 0
      %p115 = por %p113, %p114
      %s117 = sadd.s32 %s116, 1
      %p120 = scmp.eq.s32.totalorder %s21, 1
      %p121 = scmp.ne.s32.totalorder %s116, %s118
      %p122 = scmp.eq.s32.totalorder %s21, 0
      %p123 = por %p121, %p122
      %p124 = scmp.ne.s32.totalorder %s116, %s118
      %p125 = scmp.eq.s32.totalorder %s26, 1
      %p126 = por %p124, %p125
      %p127 = scmp.ne.s32.totalorder %s118, %s119
      %p128 = scmp.eq.s32.totalorder %s26, 0
      %p129 = por %p127, %p128
      %p130 = scmp.ne.s32.totalorder %s118, %s119
      %p131 = scmp.eq.s32.totalorder %s27, 1
      %p132 = por %p130, %p131
      %p134 = scmp.ne.s32.totalorder %s119, %s133
      %p135 = scmp.eq.s32.totalorder %s27, 0
      %p136 = por %p134, %p135
      %s138 = sadd.s32 %s137, 1
      %p141 = scmp.eq.s32.totalorder %s21, 1
      %p142 = scmp.ne.s32.totalorder %s137, %s139
      %p143 = scmp.eq.s32.totalorder %s21, 0
      %p144 = por %p142, %p143
      %p145 = scmp.ne.s32.totalorder %s137, %s139
      %p146 = scmp.eq.s32.totalorder %s26, 1
      %p147 = por %p145, %p146
      %p148 = scmp.ne.s32.totalorder %s139, %s140
      %p149 = scmp.eq.s32.totalorder %s26, 0
      %p150 = por %p148, %p149
      %p151 = scmp.ne.s32.totalorder %s139, %s140
      %p152 = scmp.eq.s32.totalorder %s27, 1
      %p153 = por %p151, %p152
      %p155 = scmp.ne.s32.totalorder %s140, %s154
      %p156 = scmp.eq.s32.totalorder %s27, 0
      %p157 = por %p155, %p156
      %s159 = sadd.s32 %s158, 1
      %p162 = scmp.eq.s32.totalorder %s21, 1
      %p163 = scmp.ne.s32.totalorder %s158, %s160
      %p164 = scmp.eq.s32.totalorder %s21, 0
      %p165 = por %p163, %p164
      %p166 = scmp.ne.s32.totalorder %s158, %s160
      %p167 = scmp.eq.s32.totalorder %s26, 1
      %p168 = por %p166, %p167
      %p169 = scmp.ne.s32.totalorder %s160, %s161
      %p170 = scmp.eq.s32.totalorder %s26, 0
      %p171 = por %p169, %p170
      %p172 = scmp.ne.s32.totalorder %s160, %s161
      %p173 = scmp.eq.s32.totalorder %s27, 1
      %p174 = por %p172, %p173
      %p176 = scmp.ne.s32.totalorder %s161, %s175
      %p177 = scmp.eq.s32.totalorder %s27, 0
      %p178 = por %p176, %p177
      %s180 = sadd.s32 %s179, 1
      %p183 = scmp.eq.s32.totalorder %s21, 1
      %p184 = scmp.ne.s32.totalorder %s179, %s181
      %p185 = scmp.eq.s32.totalorder %s21, 0
      %p186 = por %p184, %p185
      %p187 = scmp.ne.s32.totalorder %s179, %s181
      %p188 = scmp.eq.s32.totalorder %s26, 1
      %p189 = por %p187, %p188
      %p190 = scmp.ne.s32.totalorder %s181, %s182
      %p191 = scmp.eq.s32.totalorder %s26, 0
      %p192 = por %p190, %p191
      %p193 = scmp.ne.s32.totalorder %s181, %s182
      %p194 = scmp.eq.s32.totalorder %s27, 1
      %p195 = por %p193, %p194
      %p197 = scmp.ne.s32.totalorder %s182, %s196
      %p198 = scmp.eq.s32.totalorder %s27, 0
      %p199 = por %p197, %p198
      %s201 = sadd.s32 %s200, 1
      %p204 = scmp.eq.s32.totalorder %s21, 1
      %p205 = scmp.ne.s32.totalorder %s200, %s202
      %p206 = scmp.eq.s32.totalorder %s21, 0
      %p207 = por %p205, %p206
      %p208 = scmp.ne.s32.totalorder %s200, %s202
      %p209 = scmp.eq.s32.totalorder %s26, 1
      %p210 = por %p208, %p209
      %p211 = scmp.ne.s32.totalorder %s202, %s203
      %p212 = scmp.eq.s32.totalorder %s26, 0
      %p213 = por %p211, %p212
      %p214 = scmp.ne.s32.totalorder %s202, %s203
      %p215 = scmp.eq.s32.totalorder %s27, 1
      %p216 = por %p214, %p215
      %p218 = scmp.ne.s32.totalorder %s203, %s217
      %p219 = scmp.eq.s32.totalorder %s27, 0
      %p220 = por %p218, %p219
      %s222 = sadd.s32 %s221, 1
      %p225 = scmp.eq.s32.totalorder %s21, 1
      %p226 = scmp.ne.s32.totalorder %s221, %s223
      %p227 = scmp.eq.s32.totalorder %s21, 0
      %p228 = por %p226, %p227
      %p229 = scmp.ne.s32.totalorder %s221, %s223
      %p230 = scmp.eq.s32.totalorder %s26, 1
      %p231 = por %p229, %p230
      %p232 = scmp.ne.s32.totalorder %s223, %s224
      %p233 = scmp.eq.s32.totalorder %s26, 0
      %p234 = por %p232, %p233
      %p235 = scmp.ne.s32.totalorder %s223, %s224
      %p236 = scmp.eq.s32.totalorder %s27, 1
      %p237 = por %p235, %p236
      %p239 = scmp.ne.s32.totalorder %s224, %s238
      %p240 = scmp.eq.s32.totalorder %s27, 0
      %p241 = por %p239, %p240
      %s243 = sadd.s32 %s242, 1
      %p246 = scmp.eq.s32.totalorder %s21, 1
      %p247 = scmp.ne.s32.totalorder %s242, %s244
      %p248 = scmp.eq.s32.totalorder %s21, 0
      %p249 = por %p247, %p248
      %p250 = scmp.ne.s32.totalorder %s242, %s244
      %p251 = scmp.eq.s32.totalorder %s26, 1
      %p252 = por %p250, %p251
      %p253 = scmp.ne.s32.totalorder %s244, %s245
      %p254 = scmp.eq.s32.totalorder %s26, 0
      %p255 = por %p253, %p254
      %p256 = scmp.ne.s32.totalorder %s244, %s245
      %p257 = scmp.eq.s32.totalorder %s27, 1
      %p258 = por %p256, %p257
      %p260 = scmp.ne.s32.totalorder %s245, %s259
      %p261 = scmp.eq.s32.totalorder %s27, 0
      %p262 = por %p260, %p261
      %s264 = sadd.s32 %s263, 1
      %p267 = scmp.eq.s32.totalorder %s21, 1
      %p268 = scmp.ne.s32.totalorder %s263, %s265
      %p269 = scmp.eq.s32.totalorder %s21, 0
      %p270 = por %p268, %p269
      %p271 = scmp.ne.s32.totalorder %s263, %s265
      %p272 = scmp.eq.s32.totalorder %s26, 1
      %p273 = por %p271, %p272
      %p274 = scmp.ne.s32.totalorder %s265, %s266
      %p275 = scmp.eq.s32.totalorder %s26, 0
      %p276 = por %p274, %p275
      %p277 = scmp.ne.s32.totalorder %s265, %s266
      %p278 = scmp.eq.s32.totalorder %s27, 1
      %p279 = por %p277, %p278
      %p281 = scmp.ne.s32.totalorder %s266, %s280
      %p282 = scmp.eq.s32.totalorder %s27, 0
      %p283 = por %p281, %p282
      %s285 = sadd.s32 %s284, 1
      %p288 = scmp.eq.s32.totalorder %s21, 1
      %p289 = scmp.ne.s32.totalorder %s284, %s286
      %p290 = scmp.eq.s32.totalorder %s21, 0
      %p291 = por %p289, %p290
      %p292 = scmp.ne.s32.totalorder %s284, %s286
      %p293 = scmp.eq.s32.totalorder %s26, 1
      %p294 = por %p292, %p293
      %p295 = scmp.ne.s32.totalorder %s286, %s287
      %p296 = scmp.eq.s32.totalorder %s26, 0
      %p297 = por %p295, %p296
      %p298 = scmp.ne.s32.totalorder %s286, %s287
      %p299 = scmp.eq.s32.totalorder %s27, 1
      %p300 = por %p298, %p299
      %p302 = scmp.ne.s32.totalorder %s287, %s301
      %p303 = scmp.eq.s32.totalorder %s27, 0
      %p304 = por %p302, %p303
      %s305 = ssub.s32 %s28, %s40
      %s306 = ssub.s32 %s29, %s36
      %s307 = sor.u32 %s305, %s306
      %p308 = scmp.eq.s32.totalorder %s307, 0
      %s310 = sadd.s32 %s309, 1
      %s311 = scalar_select %p308, %s309, %s310
      %p314 = pneg %p308
      %p315 = scmp.eq.s32.totalorder %s21, 1
      %p316 = por %p314, %p315
      %p317 = scmp.ne.s32.totalorder %s309, %s312
      %p318 = scmp.eq.s32.totalorder %s21, 0
      %p319 = por %p317, %p318
      %p320 = scmp.ne.s32.totalorder %s309, %s312
      %p321 = scmp.eq.s32.totalorder %s26, 1
      %p322 = por %p320, %p321
      %p323 = scmp.ne.s32.totalorder %s312, %s313
      %p324 = scmp.eq.s32.totalorder %s26, 0
      %p325 = por %p323, %p324
      %p326 = scmp.ne.s32.totalorder %s312, %s313
      %p327 = scmp.eq.s32.totalorder %s27, 1
      %p328 = por %p326, %p327
      %p330 = scmp.ne.s32.totalorder %s313, %s329
      %p331 = scmp.eq.s32.totalorder %s27, 0
      %p332 = por %p330, %p331
      %p333 = scmp.le.s32.totalorder 1, %s21
      %p334 = scmp.lt.s32.totalorder %s21, 3
      %p335 = pnand %p333, %p334
      %p336 = pneg %p335
      // Predicated region
      $region9: #{tpu_custom_call.1} parent=5 // pred_check
        _
      $region10: #{tpu_custom_call.1} parent=5 // pred_check_branch
        %338 = sbr.rel (%p335) target = $region12
      $region11: #{tpu_custom_call.1} parent=5 // pred_region
        %s339 = ssub.s32 %s21, 1
        // Predicated region
        $region13: #{tpu_custom_call.1} parent=11 // pred_check
          %p340 = pneg %p108
        $region14: #{tpu_custom_call.1} parent=11 // pred_check_branch
          %342 = sbr.rel (%p340) target = $region16
        $region15: #{tpu_custom_call.1} parent=11 // pred_region
          _
        $region16: #{tpu_custom_call.1} parent=11 // pred_fallthru
          _
        // Predicated region
        $region17: #{tpu_custom_call.1} parent=11 // pred_check
          %p343 = pneg %p129
        $region18: #{tpu_custom_call.1} parent=11 // pred_check_branch
          %345 = sbr.rel (%p343) target = $region20
        $region19: #{tpu_custom_call.1} parent=11 // pred_region
          _
        $region20: #{tpu_custom_call.1} parent=11 // pred_fallthru
          _
        // Predicated region
        $region21: #{tpu_custom_call.1} parent=11 // pred_check
          %p346 = pneg %p150
        $region22: #{tpu_custom_call.1} parent=11 // pred_check_branch
          %348 = sbr.rel (%p346) target = $region24
        $region23: #{tpu_custom_call.1} parent=11 // pred_region
          _
        $region24: #{tpu_custom_call.1} parent=11 // pred_fallthru
          _
        // Predicated region
        $region25: #{tpu_custom_call.1} parent=11 // pred_check
          %p349 = pneg %p171
        $region26: #{tpu_custom_call.1} parent=11 // pred_check_branch
          %351 = sbr.rel (%p349) target = $region28
        $region27: #{tpu_custom_call.1} parent=11 // pred_region
          _
        $region28: #{tpu_custom_call.1} parent=11 // pred_fallthru
          _
        // Predicated region
        $region29: #{tpu_custom_call.1} parent=11 // pred_check
          %p352 = pneg %p192
        $region30: #{tpu_custom_call.1} parent=11 // pred_check_branch
          %354 = sbr.rel (%p352) target = $region32
        $region31: #{tpu_custom_call.1} parent=11 // pred_region
          _
        $region32: #{tpu_custom_call.1} parent=11 // pred_fallthru
          _
        // Predicated region
        $region33: #{tpu_custom_call.1} parent=11 // pred_check
          %p355 = pneg %p213
        $region34: #{tpu_custom_call.1} parent=11 // pred_check_branch
          %357 = sbr.rel (%p355) target = $region36
        $region35: #{tpu_custom_call.1} parent=11 // pred_region
          _
        $region36: #{tpu_custom_call.1} parent=11 // pred_fallthru
          _
        // Predicated region
        $region37: #{tpu_custom_call.1} parent=11 // pred_check
          %p358 = pneg %p234
        $region38: #{tpu_custom_call.1} parent=11 // pred_check_branch
          %360 = sbr.rel (%p358) target = $region40
        $region39: #{tpu_custom_call.1} parent=11 // pred_region
          _
        $region40: #{tpu_custom_call.1} parent=11 // pred_fallthru
          _
        // Predicated region
        $region41: #{tpu_custom_call.1} parent=11 // pred_check
          %p361 = pneg %p255
        $region42: #{tpu_custom_call.1} parent=11 // pred_check_branch
          %363 = sbr.rel (%p361) target = $region44
        $region43: #{tpu_custom_call.1} parent=11 // pred_region
          _
        $region44: #{tpu_custom_call.1} parent=11 // pred_fallthru
          _
        // Predicated region
        $region45: #{tpu_custom_call.1} parent=11 // pred_check
          %p364 = pneg %p276
        $region46: #{tpu_custom_call.1} parent=11 // pred_check_branch
          %366 = sbr.rel (%p364) target = $region48
        $region47: #{tpu_custom_call.1} parent=11 // pred_region
          _
        $region48: #{tpu_custom_call.1} parent=11 // pred_fallthru
          _
        // Predicated region
        $region49: #{tpu_custom_call.1} parent=11 // pred_check
          %p367 = pneg %p297
        $region50: #{tpu_custom_call.1} parent=11 // pred_check_branch
          %369 = sbr.rel (%p367) target = $region52
        $region51: #{tpu_custom_call.1} parent=11 // pred_region
          _
        $region52: #{tpu_custom_call.1} parent=11 // pred_fallthru
          _
      $region12: #{tpu_custom_call.1} parent=5 // pred_fallthru
        _
      %p370 = scmp.lt.s32.totalorder %s21, 2
      // Predicated region
      $region53: #{tpu_custom_call.1} parent=5 // pred_check
        %p371 = pneg %p370
      $region54: #{tpu_custom_call.1} parent=5 // pred_check_branch
        %373 = sbr.rel (%p371) target = $region56
      $region55: #{tpu_custom_call.1} parent=5 // pred_region
        // Predicated region
        $region57: #{tpu_custom_call.1} parent=55 // pred_check
          %p374 = pneg %p55
        $region58: #{tpu_custom_call.1} parent=55 // pred_check_branch
          %376 = sbr.rel (%p374) target = $region60
        $region59: #{tpu_custom_call.1} parent=55 // pred_region
          %p377 = scmp.lt.s32.totalorder %s28, 1
          %s378 = scalar_select %p377, %s28, 1
          %p379 = scmp.lt.s32.totalorder %s29, 0
          %s380 = scalar_select %p379, %s29, 0
          %s381 = sadd.s32 %s380, %s378
          %s382 = smul.addr %s381, 4
          %s383 = scalar_lea.vmem %s0, %s382
        $region60: #{tpu_custom_call.1} parent=55 // pred_fallthru
          _
        // Predicated region
        $region61: #{tpu_custom_call.1} parent=55 // pred_check
          %p384 = pneg %p81
        $region62: #{tpu_custom_call.1} parent=55 // pred_check_branch
          %386 = sbr.rel (%p384) target = $region64
        $region63: #{tpu_custom_call.1} parent=55 // pred_region
          %p387 = scmp.lt.s32.totalorder %s28, 1
          %s388 = scalar_select %p387, %s28, 1
          %s389 = smul.addr %s388, 4
          %s390 = scalar_lea.vmem %s1, %s389
        $region64: #{tpu_custom_call.1} parent=55 // pred_fallthru
          _
      $region56: #{tpu_custom_call.1} parent=5 // pred_fallthru
        _
      %p391 = scmp.le.s32.totalorder 1, %s21
      %p392 = scmp.lt.s32.totalorder %s21, 3
      %p393 = pnand %p391, %p392
      %p394 = pneg %p393
      // Predicated region
      $region65: #{tpu_custom_call.1} parent=5 // pred_check
        _
      $region66: #{tpu_custom_call.1} parent=5 // pred_check_branch
        %396 = sbr.rel (%p393) target = $region68
      $region67: #{tpu_custom_call.1} parent=5 // pred_region
        %s397 = ssub.s32 %s21, 1
        %p398 = scmp.lt.s32.totalorder %s30, 1
        %s399 = scalar_select %p398, %s30, 1
        %p400 = scmp.lt.s32.totalorder %s31, 0
        %s401 = scalar_select %p400, %s31, 0
        %s402 = sadd.s32 %s401, %s399
        %s403 = smul.addr %s402, 4
        %s404 = scalar_lea.vmem %s0, %s403
        %p405 = pneg %p61
        %p406 = pneg %p58
        %p407 = scmp.lt.s32.totalorder %s30, 1
        %s408 = scalar_select %p407, %s30, 1
        %s409 = smul.addr %s408, 4
        %s410 = scalar_lea.vmem %s1, %s409
        %p411 = pneg %p87
        %p412 = pneg %p84
        %p413 = pneg %p108
        %p414 = pneg %p105
        %p415 = pneg %p129
        %p416 = pneg %p126
        %p417 = pneg %p150
        %p418 = pneg %p147
        %p419 = pneg %p171
        %p420 = pneg %p168
        %p421 = pneg %p192
        %p422 = pneg %p189
        %p423 = pneg %p213
        %p424 = pneg %p210
        %p425 = pneg %p234
        %p426 = pneg %p231
        %p427 = pneg %p255
        %p428 = pneg %p252
        %p429 = pneg %p276
        %p430 = pneg %p273
        %p431 = pneg %p297
        %p432 = pneg %p294
        %p433 = pneg %p325
        %p434 = pneg %p322
        %s435 = sand.u32 %s312, 1
        %s436 = scalar_lea.sflag [#allocation3], %s435
        %s437 = sand.u32 %s312, 1
        %s438 = smul.addr %s437, 4
        %s439 = scalar_lea.vmem [#allocation2], %s438
        %p440 = scmp.lt.s32.totalorder %s30, 1
        %s441 = scalar_select %p440, %s30, 1
        %p442 = scmp.lt.s32.totalorder %s31, 0
        %s443 = scalar_select %p442, %s31, 0
        %s444 = sadd.s32 %s443, %s441
        %s445 = smul.addr %s444, 4
        %s446 = scalar_lea.vmem %s0, %s445
        %p447 = scmp.lt.s32.totalorder %s30, 1
        %s448 = scalar_select %p447, %s30, 1
        %s449 = smul.addr %s448, 4
        %s450 = scalar_lea.vmem %s1, %s449
        %v452 = vld [vmem:[%s446] sm:$0xf]
        %v453 = vld [vmem:[%s450] sm:$0xf]
        %v454 = vunpack.c.l.bf16 %v452
        %v455 = vld [vmem:[%s2] sm:$0xf]
        %v456 = vld [vmem:[%s2 + $0x4] sm:$0xf]
        %v457 = vld [vmem:[%s2 + $0x8] sm:$0xf]
        %v458 = vld [vmem:[%s2 + $0xc] sm:$0xf]
        %v459 = vld [vmem:[%s3] sm:$0x1]
        %v461 = vlaneseq
        %v462 = vshrl.u32 %v461, 7
        %v463 = vsub.s32 0, %v462
        %v464 = vrot.slane %v459, %v463
        %v470 = vunpack.c.l.b16 %v455
        %v471 = vunpack.c.l.b16 %v456
        %v472 = vunpack.c.l.b16 %v457
        %v473 = vunpack.c.l.b16 %v458
        %v474 = vpack.c.b16 %v471, %v470
        %v475 = vpack.c.b16 %v473, %v472
        %vm478 = vcmask 261120
        %v480 = vsel %vm478, %v452, 0
        %482 = vmatprep.subr.bf16.mxu0 0
        %483 = vmatpush1.bf16.msra.mxu0 0
        %484 = vmatprep.subr.bf16.mxu0 0
        %485 = vmatpush1.bf16.msra.mxu0 0
        %486 = vmatprep.subr.bf16.mxu0 0
        %487 = vmatpush1.bf16.msra.mxu0 0
        %488 = vmatprep.subr.bf16.mxu0 0
        %489 = vmatpush1.bf16.msra.mxu0 0
        %490 = vmatprep.subr.bf16.mxu0 0
        %491 = vmatpush1.bf16.msra.mxu0 0
        %492 = vmatprep.subr.bf16.mxu0 0
        %493 = vmatpush1.bf16.msra.mxu0 0
        %494 = vmatprep.subr.bf16.mxu0 0
        %495 = vmatpush1.bf16.msra.mxu0 %v475
        %496 = vmatprep.subr.bf16.mxu0 0
        %497 = vmatpush1.bf16.msra.mxu0 %v474
        %498 = vmatprep.subr.bf16.mxu0 0
        %499 = vmatpush2.bf16.msra.mxu0 0
        %500 = vmatprep.subr.bf16.mxu0 0
        %501 = vmatpush2.bf16.msra.mxu0 0
        %502 = vmatprep.subr.bf16.mxu0 0
        %503 = vmatpush2.bf16.msra.mxu0 0
        %504 = vmatprep.subr.bf16.mxu0 0
        %505 = vmatpush2.bf16.msra.mxu0 0
        %506 = vmatprep.subr.bf16.mxu0 0
        %507 = vmatpush2.bf16.msra.mxu0 0
        %508 = vmatprep.subr.bf16.mxu0 0
        %509 = vmatpush2.bf16.msra.mxu0 0
        %510 = vmatprep.subr.bf16.mxu0 0
        %511 = vmatpush2.bf16.msra.mxu0 0
        %512 = vmatprep.subr.bf16.mxu0 0
        %513 = vmatpush2.bf16.msra.mxu0 0
        %514 = vmatprep.mubr.bf16.mxu0 0
        %515 = vmatmul.mubr.bf16.gmra.mxu0 %v480
        %v516 = vpop.f32.mrf.mxu0
        %v517 = vadd.f32 %v464, %v516
        %v518 = vpop.f32.mrf.mxu0
        %v519 = vpop.f32.mrf.mxu0
        %v520 = vpop.f32.mrf.mxu0
        %521 = vdwg.mxu0
        %v522 = vld [vmem:[%s4] sm:$0xf]
        %v523 = vld [vmem:[%s4 + $0x4] sm:$0xf]
        %v524 = vld [vmem:[%s4 + $0x8] sm:$0xf]
        %v525 = vld [vmem:[%s4 + $0xc] sm:$0xf]
        %v526 = vld [vmem:[%s5] sm:$0x1]
        %v528 = vlaneseq
        %v529 = vshrl.u32 %v528, 7
        %v530 = vsub.s32 0, %v529
        %v531 = vrot.slane %v526, %v530
        %v537 = vunpack.c.l.b16 %v522
        %v538 = vunpack.c.l.b16 %v523
        %v539 = vunpack.c.l.b16 %v524
        %v540 = vunpack.c.l.b16 %v525
        %v541 = vpack.c.b16 %v538, %v537
        %v542 = vpack.c.b16 %v540, %v539
        %v546 = vsel %vm478, %v453, 0
        %548 = vmatprep.subr.bf16.mxu0 0
        %549 = vmatpush1.bf16.msra.mxu0 0
        %550 = vmatprep.subr.bf16.mxu0 0
        %551 = vmatpush1.bf16.msra.mxu0 0
        %552 = vmatprep.subr.bf16.mxu0 0
        %553 = vmatpush1.bf16.msra.mxu0 0
        %554 = vmatprep.subr.bf16.mxu0 0
        %555 = vmatpush1.bf16.msra.mxu0 0
        %556 = vmatprep.subr.bf16.mxu0 0
        %557 = vmatpush1.bf16.msra.mxu0 0
        %558 = vmatprep.subr.bf16.mxu0 0
        %559 = vmatpush1.bf16.msra.mxu0 0
        %560 = vmatprep.subr.bf16.mxu0 0
        %561 = vmatpush1.bf16.msra.mxu0 %v542
        %562 = vmatprep.subr.bf16.mxu0 0
        %563 = vmatpush1.bf16.msra.mxu0 %v541
        %564 = vmatprep.subr.bf16.mxu0 0
        %565 = vmatpush2.bf16.msra.mxu0 0
        %566 = vmatprep.subr.bf16.mxu0 0
        %567 = vmatpush2.bf16.msra.mxu0 0
        %568 = vmatprep.subr.bf16.mxu0 0
        %569 = vmatpush2.bf16.msra.mxu0 0
        %570 = vmatprep.subr.bf16.mxu0 0
        %571 = vmatpush2.bf16.msra.mxu0 0
        %572 = vmatprep.subr.bf16.mxu0 0
        %573 = vmatpush2.bf16.msra.mxu0 0
        %574 = vmatprep.subr.bf16.mxu0 0
        %575 = vmatpush2.bf16.msra.mxu0 0
        %576 = vmatprep.subr.bf16.mxu0 0
        %577 = vmatpush2.bf16.msra.mxu0 0
        %578 = vmatprep.subr.bf16.mxu0 0
        %579 = vmatpush2.bf16.msra.mxu0 0
        %580 = vmatprep.mubr.bf16.mxu0 0
        %581 = vmatmul.mubr.bf16.gmra.mxu0 %v546
        %v582 = vpop.f32.mrf.mxu0
        %v583 = vadd.f32 %v531, %v582
        %v584 = vpop.f32.mrf.mxu0
        %v585 = vpop.f32.mrf.mxu0
        %v586 = vpop.f32.mrf.mxu0
        %587 = vdwg.mxu0
        %v588 = vld [vmem:[%s6] sm:$0xf]
        %v589 = vld [vmem:[%s6 + $0x4] sm:$0xf]
        %v590 = vld [vmem:[%s6 + $0x8] sm:$0xf]
        %v591 = vld [vmem:[%s6 + $0xc] sm:$0xf]
        %v592 = vld [vmem:[%s7] sm:$0x1]
        %v594 = vlaneseq
        %v595 = vshrl.u32 %v594, 7
        %v596 = vsub.s32 0, %v595
        %v597 = vrot.slane %v592, %v596
        %v603 = vunpack.c.l.b16 %v588
        %v604 = vunpack.c.l.b16 %v589
        %v605 = vunpack.c.l.b16 %v590
        %v606 = vunpack.c.l.b16 %v591
        %v607 = vpack.c.b16 %v604, %v603
        %v608 = vpack.c.b16 %v606, %v605
        %611 = vmatprep.subr.bf16.mxu0 0
        %612 = vmatpush1.bf16.msra.mxu0 0
        %613 = vmatprep.subr.bf16.mxu0 0
        %614 = vmatpush1.bf16.msra.mxu0 0
        %615 = vmatprep.subr.bf16.mxu0 0
        %616 = vmatpush1.bf16.msra.mxu0 0
        %617 = vmatprep.subr.bf16.mxu0 0
        %618 = vmatpush1.bf16.msra.mxu0 0
        %619 = vmatprep.subr.bf16.mxu0 0
        %620 = vmatpush1.bf16.msra.mxu0 0
        %621 = vmatprep.subr.bf16.mxu0 0
        %622 = vmatpush1.bf16.msra.mxu0 0
        %623 = vmatprep.subr.bf16.mxu0 0
        %624 = vmatpush1.bf16.msra.mxu0 %v608
        %625 = vmatprep.subr.bf16.mxu0 0
        %626 = vmatpush1.bf16.msra.mxu0 %v607
        %627 = vmatprep.subr.bf16.mxu0 0
        %628 = vmatpush2.bf16.msra.mxu0 0
        %629 = vmatprep.subr.bf16.mxu0 0
        %630 = vmatpush2.bf16.msra.mxu0 0
        %631 = vmatprep.subr.bf16.mxu0 0
        %632 = vmatpush2.bf16.msra.mxu0 0
        %633 = vmatprep.subr.bf16.mxu0 0
        %634 = vmatpush2.bf16.msra.mxu0 0
        %635 = vmatprep.subr.bf16.mxu0 0
        %636 = vmatpush2.bf16.msra.mxu0 0
        %637 = vmatprep.subr.bf16.mxu0 0
        %638 = vmatpush2.bf16.msra.mxu0 0
        %639 = vmatprep.subr.bf16.mxu0 0
        %640 = vmatpush2.bf16.msra.mxu0 0
        %641 = vmatprep.subr.bf16.mxu0 0
        %642 = vmatpush2.bf16.msra.mxu0 0
        %643 = vmatprep.mubr.bf16.mxu0 0
        %644 = vmatmul.mubr.bf16.gmra.mxu0 %v546
        %v645 = vpop.f32.mrf.mxu0
        %v646 = vadd.f32 %v597, %v645
        %v647 = vpop.f32.mrf.mxu0
        %v648 = vpop.f32.mrf.mxu0
        %v649 = vpop.f32.mrf.mxu0
        %650 = vdwg.mxu0
        %v651 = vpack.c.bf16 %v517, %v517
        %v652 = vpack.c.bf16 %v583, %v583
        %vm653 = vcmask 130048
        %v655 = vsel %vm653, %v651, 0
        %v658 = vsel %vm653, %v652, 0
        %660 = vmatprep.subr.bf16.mxu0 0
        %661 = vmatpush1.bf16.xpose.msra.mxu0 0
        %662 = vmatprep.subr.bf16.mxu0 0
        %663 = vmatpush1.bf16.xpose.msra.mxu0 0
        %664 = vmatprep.subr.bf16.mxu0 0
        %665 = vmatpush1.bf16.xpose.msra.mxu0 0
        %666 = vmatprep.subr.bf16.mxu0 0
        %667 = vmatpush1.bf16.xpose.msra.mxu0 0
        %668 = vmatprep.subr.bf16.mxu0 0
        %669 = vmatpush1.bf16.xpose.msra.mxu0 0
        %670 = vmatprep.subr.bf16.mxu0 0
        %671 = vmatpush1.bf16.xpose.msra.mxu0 0
        %672 = vmatprep.subr.bf16.mxu0 0
        %673 = vmatpush1.bf16.xpose.msra.mxu0 0
        %674 = vmatprep.subr.bf16.mxu0 0
        %675 = vmatpush1.bf16.xpose.msra.mxu0 %v658
        %676 = vmatprep.subr.bf16.mxu0 0
        %677 = vmatpush2.bf16.xpose.msra.mxu0 0
        %678 = vmatprep.subr.bf16.mxu0 0
        %679 = vmatpush2.bf16.xpose.msra.mxu0 0
        %680 = vmatprep.subr.bf16.mxu0 0
        %681 = vmatpush2.bf16.xpose.msra.mxu0 0
        %682 = vmatprep.subr.bf16.mxu0 0
        %683 = vmatpush2.bf16.xpose.msra.mxu0 0
        %684 = vmatprep.subr.bf16.mxu0 0
        %685 = vmatpush2.bf16.xpose.msra.mxu0 0
        %686 = vmatprep.subr.bf16.mxu0 0
        %687 = vmatpush2.bf16.xpose.msra.mxu0 0
        %688 = vmatprep.subr.bf16.mxu0 0
        %689 = vmatpush2.bf16.xpose.msra.mxu0 0
        %690 = vmatprep.subr.bf16.mxu0 0
        %691 = vmatpush2.bf16.xpose.msra.mxu0 0
        %692 = vmatprep.mubr.bf16.mxu0 0
        %693 = vmatmul.mubr.bf16.gmra.mxu0 %v655
        %v694 = vpop.f32.mrf.mxu0
        %v695 = vadd.f32 0.0, %v694
        %v696 = vpop.f32.mrf.mxu0
        %v697 = vpop.f32.mrf.mxu0
        %v698 = vpop.f32.mrf.mxu0
        %699 = vdwg.mxu0
        %vm700 = vcmask 64512
        %v701 = vsel %vm700, %v695, -inf
        %702 = vmax.xlane.f32.xlu0 %v701
        %v703 = vpop.xlane.xlu0 %702
        %v704 = vsub.f32 %v695, %v703
        %v705 = vmul.f32 %v704, 1.442695
        %v706 = vpow.pop %v705
        %v707 = vsel %vm700, %v706, 0.0
        %708 = vadd.xlane.f32.xlu0 %v707
        %v709 = vpop.xlane.xlu0 %708
        %v710 = vpack.c.bf16 %v706, %v706
        %v711 = vpack.c.bf16 %v646, %v646
        %v713 = vsel %vm700, %v710, 0
        %vm715 = vcmask 1043456
        %v717 = vsel %vm715, %v711, 0
        %719 = vmatprep.subr.bf16.mxu0 0
        %720 = vmatpush1.bf16.msra.mxu0 0
        %721 = vmatprep.subr.bf16.mxu0 0
        %722 = vmatpush1.bf16.msra.mxu0 0
        %723 = vmatprep.subr.bf16.mxu0 0
        %724 = vmatpush1.bf16.msra.mxu0 0
        %725 = vmatprep.subr.bf16.mxu0 0
        %726 = vmatpush1.bf16.msra.mxu0 0
        %727 = vmatprep.subr.bf16.mxu0 0
        %728 = vmatpush1.bf16.msra.mxu0 0
        %729 = vmatprep.subr.bf16.mxu0 0
        %730 = vmatpush1.bf16.msra.mxu0 0
        %731 = vmatprep.subr.bf16.mxu0 0
        %732 = vmatpush1.bf16.msra.mxu0 0
        %733 = vmatprep.subr.bf16.mxu0 0
        %734 = vmatpush1.bf16.msra.mxu0 %v717
        %735 = vmatprep.subr.bf16.mxu0 0
        %736 = vmatpush2.bf16.msra.mxu0 0
        %737 = vmatprep.subr.bf16.mxu0 0
        %738 = vmatpush2.bf16.msra.mxu0 0
        %739 = vmatprep.subr.bf16.mxu0 0
        %740 = vmatpush2.bf16.msra.mxu0 0
        %741 = vmatprep.subr.bf16.mxu0 0
        %742 = vmatpush2.bf16.msra.mxu0 0
        %743 = vmatprep.subr.bf16.mxu0 0
        %744 = vmatpush2.bf16.msra.mxu0 0
        %745 = vmatprep.subr.bf16.mxu0 0
        %746 = vmatpush2.bf16.msra.mxu0 0
        %747 = vmatprep.subr.bf16.mxu0 0
        %748 = vmatpush2.bf16.msra.mxu0 0
        %749 = vmatprep.subr.bf16.mxu0 0
        %750 = vmatpush2.bf16.msra.mxu0 0
        %751 = vmatprep.mubr.bf16.mxu0 0
        %752 = vmatmul.mubr.bf16.gmra.mxu0 %v713
        %v753 = vpop.f32.mrf.mxu0
        %v754 = vadd.f32 0.0, %v753
        %v755 = vpop.f32.mrf.mxu0
        %v756 = vpop.f32.mrf.mxu0
        %v757 = vpop.f32.mrf.mxu0
        %758 = vdwg.mxu0
        %v759 = vrcp.pop %v709
        %v760 = vmul.f32 %v754, %v759
        %v761 = vpack.c.bf16 %v760, %v760
        %v762 = vld [vmem:[%s8] sm:$0xf]
        %v763 = vld [vmem:[%s8 + $0x4] sm:$0xf]
        %s764 = scalar_lea.vmem %s2, 16
        %v765 = vld [vmem:[%s764] sm:$0xf]
        %v766 = vld [vmem:[%s764 + $0x4] sm:$0xf]
        %v767 = vld [vmem:[%s764 + $0x8] sm:$0xf]
        %v768 = vld [vmem:[%s764 + $0xc] sm:$0xf]
        %s769 = scalar_lea.vmem %s3, 1
        %v770 = vld [vmem:[%s769] sm:$0x1]
        %v772 = vlaneseq
        %v773 = vshrl.u32 %v772, 7
        %v774 = vsub.s32 0, %v773
        %v775 = vrot.slane %v770, %v774
        %v781 = vunpack.c.l.b16 %v765
        %v782 = vunpack.c.l.b16 %v766
        %v783 = vunpack.c.l.b16 %v767
        %v784 = vunpack.c.l.b16 %v768
        %v785 = vpack.c.b16 %v782, %v781
        %v786 = vpack.c.b16 %v784, %v783
        %789 = vmatprep.subr.bf16.mxu0 0
        %790 = vmatpush1.bf16.msra.mxu0 0
        %791 = vmatprep.subr.bf16.mxu0 0
        %792 = vmatpush1.bf16.msra.mxu0 0
        %793 = vmatprep.subr.bf16.mxu0 0
        %794 = vmatpush1.bf16.msra.mxu0 0
        %795 = vmatprep.subr.bf16.mxu0 0
        %796 = vmatpush1.bf16.msra.mxu0 0
        %797 = vmatprep.subr.bf16.mxu0 0
        %798 = vmatpush1.bf16.msra.mxu0 0
        %799 = vmatprep.subr.bf16.mxu0 0
        %800 = vmatpush1.bf16.msra.mxu0 0
        %801 = vmatprep.subr.bf16.mxu0 0
        %802 = vmatpush1.bf16.msra.mxu0 %v786
        %803 = vmatprep.subr.bf16.mxu0 0
        %804 = vmatpush1.bf16.msra.mxu0 %v785
        %805 = vmatprep.subr.bf16.mxu0 0
        %806 = vmatpush2.bf16.msra.mxu0 0
        %807 = vmatprep.subr.bf16.mxu0 0
        %808 = vmatpush2.bf16.msra.mxu0 0
        %809 = vmatprep.subr.bf16.mxu0 0
        %810 = vmatpush2.bf16.msra.mxu0 0
        %811 = vmatprep.subr.bf16.mxu0 0
        %812 = vmatpush2.bf16.msra.mxu0 0
        %813 = vmatprep.subr.bf16.mxu0 0
        %814 = vmatpush2.bf16.msra.mxu0 0
        %815 = vmatprep.subr.bf16.mxu0 0
        %816 = vmatpush2.bf16.msra.mxu0 0
        %817 = vmatprep.subr.bf16.mxu0 0
        %818 = vmatpush2.bf16.msra.mxu0 0
        %819 = vmatprep.subr.bf16.mxu0 0
        %820 = vmatpush2.bf16.msra.mxu0 0
        %821 = vmatprep.mubr.bf16.mxu0 0
        %822 = vmatmul.mubr.bf16.gmra.mxu0 %v480
        %v823 = vpop.f32.mrf.mxu0
        %v824 = vadd.f32 %v775, %v823
        %v825 = vpop.f32.mrf.mxu0
        %v826 = vpop.f32.mrf.mxu0
        %v827 = vpop.f32.mrf.mxu0
        %828 = vdwg.mxu0
        %s829 = scalar_lea.vmem %s4, 16
        %v830 = vld [vmem:[%s829] sm:$0xf]
        %v831 = vld [vmem:[%s829 + $0x4] sm:$0xf]
        %v832 = vld [vmem:[%s829 + $0x8] sm:$0xf]
        %v833 = vld [vmem:[%s829 + $0xc] sm:$0xf]
        %s834 = scalar_lea.vmem %s5, 1
        %v835 = vld [vmem:[%s834] sm:$0x1]
        %v837 = vlaneseq
        %v838 = vshrl.u32 %v837, 7
        %v839 = vsub.s32 0, %v838
        %v840 = vrot.slane %v835, %v839
        %v846 = vunpack.c.l.b16 %v830
        %v847 = vunpack.c.l.b16 %v831
        %v848 = vunpack.c.l.b16 %v832
        %v849 = vunpack.c.l.b16 %v833
        %v850 = vpack.c.b16 %v847, %v846
        %v851 = vpack.c.b16 %v849, %v848
        %854 = vmatprep.subr.bf16.mxu0 0
        %855 = vmatpush1.bf16.msra.mxu0 0
        %856 = vmatprep.subr.bf16.mxu0 0
        %857 = vmatpush1.bf16.msra.mxu0 0
        %858 = vmatprep.subr.bf16.mxu0 0
        %859 = vmatpush1.bf16.msra.mxu0 0
        %860 = vmatprep.subr.bf16.mxu0 0
        %861 = vmatpush1.bf16.msra.mxu0 0
        %862 = vmatprep.subr.bf16.mxu0 0
        %863 = vmatpush1.bf16.msra.mxu0 0
        %864 = vmatprep.subr.bf16.mxu0 0
        %865 = vmatpush1.bf16.msra.mxu0 0
        %866 = vmatprep.subr.bf16.mxu0 0
        %867 = vmatpush1.bf16.msra.mxu0 %v851
        %868 = vmatprep.subr.bf16.mxu0 0
        %869 = vmatpush1.bf16.msra.mxu0 %v850
        %870 = vmatprep.subr.bf16.mxu0 0
        %871 = vmatpush2.bf16.msra.mxu0 0
        %872 = vmatprep.subr.bf16.mxu0 0
        %873 = vmatpush2.bf16.msra.mxu0 0
        %874 = vmatprep.subr.bf16.mxu0 0
        %875 = vmatpush2.bf16.msra.mxu0 0
        %876 = vmatprep.subr.bf16.mxu0 0
        %877 = vmatpush2.bf16.msra.mxu0 0
        %878 = vmatprep.subr.bf16.mxu0 0
        %879 = vmatpush2.bf16.msra.mxu0 0
        %880 = vmatprep.subr.bf16.mxu0 0
        %881 = vmatpush2.bf16.msra.mxu0 0
        %882 = vmatprep.subr.bf16.mxu0 0
        %883 = vmatpush2.bf16.msra.mxu0 0
        %884 = vmatprep.subr.bf16.mxu0 0
        %885 = vmatpush2.bf16.msra.mxu0 0
        %886 = vmatprep.mubr.bf16.mxu0 0
        %887 = vmatmul.mubr.bf16.gmra.mxu0 %v546
        %v888 = vpop.f32.mrf.mxu0
        %v889 = vadd.f32 %v840, %v888
        %v890 = vpop.f32.mrf.mxu0
        %v891 = vpop.f32.mrf.mxu0
        %v892 = vpop.f32.mrf.mxu0
        %893 = vdwg.mxu0
        %s894 = scalar_lea.vmem %s6, 16
        %v895 = vld [vmem:[%s894] sm:$0xf]
        %v896 = vld [vmem:[%s894 + $0x4] sm:$0xf]
        %v897 = vld [vmem:[%s894 + $0x8] sm:$0xf]
        %v898 = vld [vmem:[%s894 + $0xc] sm:$0xf]
        %s899 = scalar_lea.vmem %s7, 1
        %v900 = vld [vmem:[%s899] sm:$0x1]
        %v902 = vlaneseq
        %v903 = vshrl.u32 %v902, 7
        %v904 = vsub.s32 0, %v903
        %v905 = vrot.slane %v900, %v904
        %v911 = vunpack.c.l.b16 %v895
        %v912 = vunpack.c.l.b16 %v896
        %v913 = vunpack.c.l.b16 %v897
        %v914 = vunpack.c.l.b16 %v898
        %v915 = vpack.c.b16 %v912, %v911
        %v916 = vpack.c.b16 %v914, %v913
        %919 = vmatprep.subr.bf16.mxu0 0
        %920 = vmatpush1.bf16.msra.mxu0 0
        %921 = vmatprep.subr.bf16.mxu0 0
        %922 = vmatpush1.bf16.msra.mxu0 0
        %923 = vmatprep.subr.bf16.mxu0 0
        %924 = vmatpush1.bf16.msra.mxu0 0
        %925 = vmatprep.subr.bf16.mxu0 0
        %926 = vmatpush1.bf16.msra.mxu0 0
        %927 = vmatprep.subr.bf16.mxu0 0
        %928 = vmatpush1.bf16.msra.mxu0 0
        %929 = vmatprep.subr.bf16.mxu0 0
        %930 = vmatpush1.bf16.msra.mxu0 0
        %931 = vmatprep.subr.bf16.mxu0 0
        %932 = vmatpush1.bf16.msra.mxu0 %v916
        %933 = vmatprep.subr.bf16.mxu0 0
        %934 = vmatpush1.bf16.msra.mxu0 %v915
        %935 = vmatprep.subr.bf16.mxu0 0
        %936 = vmatpush2.bf16.msra.mxu0 0
        %937 = vmatprep.subr.bf16.mxu0 0
        %938 = vmatpush2.bf16.msra.mxu0 0
        %939 = vmatprep.subr.bf16.mxu0 0
        %940 = vmatpush2.bf16.msra.mxu0 0
        %941 = vmatprep.subr.bf16.mxu0 0
        %942 = vmatpush2.bf16.msra.mxu0 0
        %943 = vmatprep.subr.bf16.mxu0 0
        %944 = vmatpush2.bf16.msra.mxu0 0
        %945 = vmatprep.subr.bf16.mxu0 0
        %946 = vmatpush2.bf16.msra.mxu0 0
        %947 = vmatprep.subr.bf16.mxu0 0
        %948 = vmatpush2.bf16.msra.mxu0 0
        %949 = vmatprep.subr.bf16.mxu0 0
        %950 = vmatpush2.bf16.msra.mxu0 0
        %951 = vmatprep.mubr.bf16.mxu0 0
        %952 = vmatmul.mubr.bf16.gmra.mxu0 %v546
        %v953 = vpop.f32.mrf.mxu0
        %v954 = vadd.f32 %v905, %v953
        %v955 = vpop.f32.mrf.mxu0
        %v956 = vpop.f32.mrf.mxu0
        %v957 = vpop.f32.mrf.mxu0
        %958 = vdwg.mxu0
        %v959 = vpack.c.bf16 %v824, %v824
        %v960 = vpack.c.bf16 %v889, %v889
        %v962 = vsel %vm653, %v959, 0
        %v965 = vsel %vm653, %v960, 0
        %967 = vmatprep.subr.bf16.mxu0 0
        %968 = vmatpush1.bf16.xpose.msra.mxu0 0
        %969 = vmatprep.subr.bf16.mxu0 0
        %970 = vmatpush1.bf16.xpose.msra.mxu0 0
        %971 = vmatprep.subr.bf16.mxu0 0
        %972 = vmatpush1.bf16.xpose.msra.mxu0 0
        %973 = vmatprep.subr.bf16.mxu0 0
        %974 = vmatpush1.bf16.xpose.msra.mxu0 0
        %975 = vmatprep.subr.bf16.mxu0 0
        %976 = vmatpush1.bf16.xpose.msra.mxu0 0
        %977 = vmatprep.subr.bf16.mxu0 0
        %978 = vmatpush1.bf16.xpose.msra.mxu0 0
        %979 = vmatprep.subr.bf16.mxu0 0
        %980 = vmatpush1.bf16.xpose.msra.mxu0 0
        %981 = vmatprep.subr.bf16.mxu0 0
        %982 = vmatpush1.bf16.xpose.msra.mxu0 %v965
        %983 = vmatprep.subr.bf16.mxu0 0
        %984 = vmatpush2.bf16.xpose.msra.mxu0 0
        %985 = vmatprep.subr.bf16.mxu0 0
        %986 = vmatpush2.bf16.xpose.msra.mxu0 0
        %987 = vmatprep.subr.bf16.mxu0 0
        %988 = vmatpush2.bf16.xpose.msra.mxu0 0
        %989 = vmatprep.subr.bf16.mxu0 0
        %990 = vmatpush2.bf16.xpose.msra.mxu0 0
        %991 = vmatprep.subr.bf16.mxu0 0
        %992 = vmatpush2.bf16.xpose.msra.mxu0 0
        %993 = vmatprep.subr.bf16.mxu0 0
        %994 = vmatpush2.bf16.xpose.msra.mxu0 0
        %995 = vmatprep.subr.bf16.mxu0 0
        %996 = vmatpush2.bf16.xpose.msra.mxu0 0
        %997 = vmatprep.subr.bf16.mxu0 0
        %998 = vmatpush2.bf16.xpose.msra.mxu0 0
        %999 = vmatprep.mubr.bf16.mxu0 0
        %1000 = vmatmul.mubr.bf16.gmra.mxu0 %v962
        %v1001 = vpop.f32.mrf.mxu0
        %v1002 = vadd.f32 0.0, %v1001
        %v1003 = vpop.f32.mrf.mxu0
        %v1004 = vpop.f32.mrf.mxu0
        %v1005 = vpop.f32.mrf.mxu0
        %1006 = vdwg.mxu0
        %v1007 = vsel %vm700, %v1002, -inf
        %1008 = vmax.xlane.f32.xlu0 %v1007
        %v1009 = vpop.xlane.xlu0 %1008
        %v1010 = vsub.f32 %v1002, %v1009
        %v1011 = vmul.f32 %v1010, 1.442695
        %v1012 = vpow.pop %v1011
        %v1013 = vsel %vm700, %v1012, 0.0
        %1014 = vadd.xlane.f32.xlu0 %v1013
        %v1015 = vpop.xlane.xlu0 %1014
        %v1016 = vpack.c.bf16 %v1012, %v1012
        %v1017 = vpack.c.bf16 %v954, %v954
        %v1019 = vsel %vm700, %v1016, 0
        %v1022 = vsel %vm715, %v1017, 0
        %1024 = vmatprep.subr.bf16.mxu0 0
        %1025 = vmatpush1.bf16.msra.mxu0 0
        %1026 = vmatprep.subr.bf16.mxu0 0
        %1027 = vmatpush1.bf16.msra.mxu0 0
        %1028 = vmatprep.subr.bf16.mxu0 0
        %1029 = vmatpush1.bf16.msra.mxu0 0
        %1030 = vmatprep.subr.bf16.mxu0 0
        %1031 = vmatpush1.bf16.msra.mxu0 0
        %1032 = vmatprep.subr.bf16.mxu0 0
        %1033 = vmatpush1.bf16.msra.mxu0 0
        %1034 = vmatprep.subr.bf16.mxu0 0
        %1035 = vmatpush1.bf16.msra.mxu0 0
        %1036 = vmatprep.subr.bf16.mxu0 0
        %1037 = vmatpush1.bf16.msra.mxu0 0
        %1038 = vmatprep.subr.bf16.mxu0 0
        %1039 = vmatpush1.bf16.msra.mxu0 %v1022
        %1040 = vmatprep.subr.bf16.mxu0 0
        %1041 = vmatpush2.bf16.msra.mxu0 0
        %1042 = vmatprep.subr.bf16.mxu0 0
        %1043 = vmatpush2.bf16.msra.mxu0 0
        %1044 = vmatprep.subr.bf16.mxu0 0
        %1045 = vmatpush2.bf16.msra.mxu0 0
        %1046 = vmatprep.subr.bf16.mxu0 0
        %1047 = vmatpush2.bf16.msra.mxu0 0
        %1048 = vmatprep.subr.bf16.mxu0 0
        %1049 = vmatpush2.bf16.msra.mxu0 0
        %1050 = vmatprep.subr.bf16.mxu0 0
        %1051 = vmatpush2.bf16.msra.mxu0 0
        %1052 = vmatprep.subr.bf16.mxu0 0
        %1053 = vmatpush2.bf16.msra.mxu0 0
        %1054 = vmatprep.subr.bf16.mxu0 0
        %1055 = vmatpush2.bf16.msra.mxu0 0
        %1056 = vmatprep.mubr.bf16.mxu0 0
        %1057 = vmatmul.mubr.bf16.gmra.mxu0 %v1019
        %v1058 = vpop.f32.mrf.mxu0
        %v1059 = vadd.f32 0.0, %v1058
        %v1060 = vpop.f32.mrf.mxu0
        %v1061 = vpop.f32.mrf.mxu0
        %v1062 = vpop.f32.mrf.mxu0
        %1063 = vdwg.mxu0
        %v1064 = vrcp.pop %v1015
        %v1065 = vmul.f32 %v1059, %v1064
        %v1066 = vpack.c.bf16 %v1065, %v1065
        %s1067 = scalar_lea.vmem %s8, 8
        %v1068 = vld [vmem:[%s1067] sm:$0xf]
        %v1069 = vld [vmem:[%s1067 + $0x4] sm:$0xf]
        %v1072 = vunpack.c.l.b16 %v1068
        %v1073 = vunpack.c.l.b16 %v1069
        %v1074 = vpack.c.b16 %v1073, %v1072
        %v1077 = vsel %vm653, %v1066, 0
        %1079 = vmatprep.subr.bf16.mxu0 0
        %1080 = vmatpush1.bf16.msra.mxu0 0
        %1081 = vmatprep.subr.bf16.mxu0 0
        %1082 = vmatpush1.bf16.msra.mxu0 0
        %1083 = vmatprep.subr.bf16.mxu0 0
        %1084 = vmatpush1.bf16.msra.mxu0 0
        %1085 = vmatprep.subr.bf16.mxu0 0
        %1086 = vmatpush1.bf16.msra.mxu0 0
        %1087 = vmatprep.subr.bf16.mxu0 0
        %1088 = vmatpush1.bf16.msra.mxu0 0
        %1089 = vmatprep.subr.bf16.mxu0 0
        %1090 = vmatpush1.bf16.msra.mxu0 0
        %1091 = vmatprep.subr.bf16.mxu0 0
        %1092 = vmatpush1.bf16.msra.mxu0 0
        %1093 = vmatprep.subr.bf16.mxu0 0
        %1094 = vmatpush1.bf16.msra.mxu0 %v1074
        %1095 = vmatprep.subr.bf16.mxu0 0
        %1096 = vmatpush2.bf16.msra.mxu0 0
        %1097 = vmatprep.subr.bf16.mxu0 0
        %1098 = vmatpush2.bf16.msra.mxu0 0
        %1099 = vmatprep.subr.bf16.mxu0 0
        %1100 = vmatpush2.bf16.msra.mxu0 0
        %1101 = vmatprep.subr.bf16.mxu0 0
        %1102 = vmatpush2.bf16.msra.mxu0 0
        %1103 = vmatprep.subr.bf16.mxu0 0
        %1104 = vmatpush2.bf16.msra.mxu0 0
        %1105 = vmatprep.subr.bf16.mxu0 0
        %1106 = vmatpush2.bf16.msra.mxu0 0
        %1107 = vmatprep.subr.bf16.mxu0 0
        %1108 = vmatpush2.bf16.msra.mxu0 0
        %1109 = vmatprep.subr.bf16.mxu0 0
        %1110 = vmatpush2.bf16.msra.mxu0 0
        %1111 = vmatprep.mubr.bf16.mxu0 0
        %1112 = vmatmul.mubr.bf16.gmra.mxu0 %v1077
        %v1113 = vpop.f32.mrf.mxu0
        %v1114 = vadd.f32 0.0, %v1113
        %v1115 = vpop.f32.mrf.mxu0
        %v1116 = vpop.f32.mrf.mxu0
        %v1117 = vpop.f32.mrf.mxu0
        %1118 = vdwg.mxu0
        %v1121 = vunpack.c.l.b16 %v762
        %v1122 = vunpack.c.l.b16 %v763
        %v1123 = vpack.c.b16 %v1122, %v1121
        %v1126 = vsel %vm653, %v761, 0
        %1128 = vmatprep.subr.bf16.mxu0 0
        %1129 = vmatpush1.bf16.msra.mxu0 0
        %1130 = vmatprep.subr.bf16.mxu0 0
        %1131 = vmatpush1.bf16.msra.mxu0 0
        %1132 = vmatprep.subr.bf16.mxu0 0
        %1133 = vmatpush1.bf16.msra.mxu0 0
        %1134 = vmatprep.subr.bf16.mxu0 0
        %1135 = vmatpush1.bf16.msra.mxu0 0
        %1136 = vmatprep.subr.bf16.mxu0 0
        %1137 = vmatpush1.bf16.msra.mxu0 0
        %1138 = vmatprep.subr.bf16.mxu0 0
        %1139 = vmatpush1.bf16.msra.mxu0 0
        %1140 = vmatprep.subr.bf16.mxu0 0
        %1141 = vmatpush1.bf16.msra.mxu0 0
        %1142 = vmatprep.subr.bf16.mxu0 0
        %1143 = vmatpush1.bf16.msra.mxu0 %v1123
        %1144 = vmatprep.subr.bf16.mxu0 0
        %1145 = vmatpush2.bf16.msra.mxu0 0
        %1146 = vmatprep.subr.bf16.mxu0 0
        %1147 = vmatpush2.bf16.msra.mxu0 0
        %1148 = vmatprep.subr.bf16.mxu0 0
        %1149 = vmatpush2.bf16.msra.mxu0 0
        %1150 = vmatprep.subr.bf16.mxu0 0
        %1151 = vmatpush2.bf16.msra.mxu0 0
        %1152 = vmatprep.subr.bf16.mxu0 0
        %1153 = vmatpush2.bf16.msra.mxu0 0
        %1154 = vmatprep.subr.bf16.mxu0 0
        %1155 = vmatpush2.bf16.msra.mxu0 0
        %1156 = vmatprep.subr.bf16.mxu0 0
        %1157 = vmatpush2.bf16.msra.mxu0 0
        %1158 = vmatprep.subr.bf16.mxu0 0
        %1159 = vmatpush2.bf16.msra.mxu0 0
        %1160 = vmatprep.mubr.bf16.mxu0 0
        %1161 = vmatmul.mubr.bf16.gmra.mxu0 %v1126
        %v1162 = vpop.f32.mrf.mxu0
        %v1163 = vadd.f32 %v1114, %v1162
        %v1164 = vpop.f32.mrf.mxu0
        %v1165 = vpop.f32.mrf.mxu0
        %v1166 = vpop.f32.mrf.mxu0
        %1167 = vdwg.mxu0
        %v1168 = vld [vmem:[%s9] sm:$0x1]
        %v1170 = vlaneseq
        %v1171 = vshrl.u32 %v1170, 7
        %v1172 = vsub.s32 0, %v1171
        %v1173 = vrot.slane %v1168, %v1172
        %v1175 = vadd.f32 %v1163, %v1173
        %v1176 = vadd.f32 %v1175, %v454
        %v1177 = vld [vmem:[%s10] sm:$0x1]
        %v1178 = vld [vmem:[%s11] sm:$0x1]
        %v1179 = vsel %vm478, %v1176, 0.0
        %1180 = vadd.xlane.f32.xlu0 %v1179
        %v1181 = vpop.xlane.xlu0 %1180
        %v1182 = vrcp.pop 32.0
        %v1183 = vmul.f32 %v1181, %v1182
        %v1184 = vsub.f32 %v1176, %v1183
        %v1185 = vmul.f32 %v1184, %v1184
        %v1186 = vsel %vm478, %v1185, 0.0
        %1187 = vadd.xlane.f32.xlu0 %v1186
        %v1188 = vpop.xlane.xlu0 %1187
        %v1189 = vmul.f32 %v1188, %v1182
        %v1190 = vadd.f32 %v1189, 1e-05
        %v1191 = vrsqrt.pop %v1190
        %v1192 = vmul.f32 %v1184, %v1191
        %v1194 = vlaneseq
        %v1195 = vshrl.u32 %v1194, 7
        %v1196 = vsub.s32 0, %v1195
        %v1197 = vrot.slane %v1177, %v1196
        %v1199 = vmul.f32 %v1192, %v1197
        %v1201 = vlaneseq
        %v1202 = vshrl.u32 %v1201, 7
        %v1203 = vsub.s32 0, %v1202
        %v1204 = vrot.slane %v1178, %v1203
        %v1206 = vadd.f32 %v1199, %v1204
        %v1207 = vpack.c.bf16 %v1206, %v1206
        %vm1208 = vcmask 257024
        %1209 = vst.msk [vmem:[%s439] sm:$0xf] %vm1208, %v1207
        %s1210 = sand.u32 %s312, 1
        %s1211 = scalar_lea.sflag [#allocation3], %s1210
        %s1212 = sand.u32 %s312, 1
        %s1213 = smul.addr %s1212, 4
        %s1214 = scalar_lea.vmem [#allocation2], %s1213
        // Predicated region
        $region69: #{tpu_custom_call.1} parent=67 // pred_check
          %p1215 = pneg %p322
        $region70: #{tpu_custom_call.1} parent=67 // pred_check_branch
          %1217 = sbr.rel (%p1215) target = $region72
        $region71: #{tpu_custom_call.1} parent=67 // pred_region
          %s1219 = ssub.s32 64, 64
          %1220 = vsyncadd %s1211, %s1219
          %s1221 = sadd.s32 %s31, %s30
          %s1222 = smul.addr %s1221, 64
          %s1223 = scalar_lea.hbm %s12, %s1222
          %s1225 = sshll.u32 %s1214, 4
          %s1226 = int_to_ptr.vmem [resolvable:$true] %s1225
          %1228 = dma.vmem_to_hbm [thread:$0]  %s1226, 64, %s1223, %s1211
        $region72: #{tpu_custom_call.1} parent=67 // pred_fallthru
          _
      $region68: #{tpu_custom_call.1} parent=5 // pred_fallthru
        _
      %p1229 = scmp.le.s32.totalorder 2, %s21
      // Predicated region
      $region73: #{tpu_custom_call.1} parent=5 // pred_check
        %p1230 = pneg %p1229
      $region74: #{tpu_custom_call.1} parent=5 // pred_check_branch
        %1232 = sbr.rel (%p1230) target = $region76
      $region75: #{tpu_custom_call.1} parent=5 // pred_region
        %s1233 = ssub.s32 %s21, 2
        // Predicated region
        $region77: #{tpu_custom_call.1} parent=75 // pred_check
          %p1234 = pneg %p328
        $region78: #{tpu_custom_call.1} parent=75 // pred_check_branch
          %1236 = sbr.rel (%p1234) target = $region80
        $region79: #{tpu_custom_call.1} parent=75 // pred_region
          %s1237 = sand.u32 %s313, 1
          %s1238 = scalar_lea.sflag [#allocation3], %s1237
          %s1239 = sand.u32 %s313, 1
          %s1240 = smul.addr %s1239, 4
          %s1241 = scalar_lea.vmem [#allocation2], %s1240
          %1242 = dma.done %s1238, 64
        $region80: #{tpu_custom_call.1} parent=75 // pred_fallthru
          _
      $region76: #{tpu_custom_call.1} parent=5 // pred_fallthru
        _
    $region6: #{tpu_custom_call.1} parent=1 // loop_footer
      %s25 = sadd.s32 1, %s21
    $region7: #{tpu_custom_call.1} parent=1 // loop_footer_branch
      %20 = sbr.rel target = $region3
    $region8: #{tpu_custom_call.1} parent=1 // loop_exit
      _
    %1243 = vsyncpa [#allocation3], 1
    %s1244 = scalar_lea.sflag [#allocation3], 1
    %1245 = vsyncpa %s1244, 1

</llo_original>
